<compile_context>
chip_gen: v6e
topology: v6e:2x2x1
jax: 0.10.0
libtpu: 0.0.40
codegen_flags: <defaults>
</compile_context>

<pallas_src>
import functools

import jax
import jax.numpy as jnp
from jax import lax
from jax.experimental import pallas as pl
from jax.experimental.pallas import tpu as pltpu


# ----------------------------------------------------------------------------
# Fused Pallas kernel: 2-layer LSTM recurrence + prediction head (padded to 128)
# ----------------------------------------------------------------------------
def dkt_fused_kernel(xg_ref, cnp_ref, h0_ref, c0_ref, whh0_ref, *rest,
                     num_layers, hidden):
    """One (batch-block, time-chunk) grid step of the fused LSTM stack + head."""
    nl, H = num_layers, hidden
    Tc = xg_ref.shape[0]                 # time steps in this chunk
    Bb = xg_ref.shape[1]                 # batch rows in this block
    bf16 = jnp.bfloat16

    # ---- unpack remaining refs: upper-layer weights, head weight, out, scratch
    upper = []
    idx = 0
    for _ in range(nl - 1):
        upper.append((rest[idx], rest[idx + 1]))
        idx += 2
    wph_ref = rest[idx]
    logits_ref = rest[idx + 1]
    h_scr, c_scr = rest[idx + 2], rest[idx + 3]

    # ---- first time-chunk of each batch block: load the initial LSTM state --
    @pl.when(pl.program_id(1) == 0)
    def _():
        h_scr[...] = h0_ref[...]
        c_scr[...] = c0_ref[...]

    # ---- hoist weight loads / bias broadcasts out of the sequential loop ----
    w_hh0 = whh0_ref[...]                                     # (H, 4H) bf16
    w_cat, b_up = [], []
    for (wc_ref, b_ref) in upper:
        w_cat.append(wc_ref[...])                             # (2H, 4H) bf16
        b_up.append(jnp.broadcast_to(b_ref[...], (Bb, 4 * H)))
    wph = wph_ref[...]                                        # (H, NP) bf16

    def lstm_cell(gates, c_prev):
        # 2 full-vreg EUP pushes (sigmoid + tanh over all 4H = 128 lanes),
        # then cheap static lane slices; state updates stay f32.
        sg = jax.nn.sigmoid(gates)
        th = jnp.tanh(gates)
        i_g = sg[:, 0 * H:1 * H]
        f_g = sg[:, 1 * H:2 * H]
        g_g = th[:, 2 * H:3 * H]
        o_g = sg[:, 3 * H:4 * H]
        c_new = f_g * c_prev + i_g * g_g
        h_new = o_g * jnp.tanh(c_new)
        return h_new, c_new

    def body(t, carry):
        hs, cs = carry
        # Layer 0: input projection (x @ W_ih0 + b0) precomputed outside the
        # recurrence; only the recurrent matmul runs per step.
        gates = xg_ref[t] + jnp.dot(hs[0].astype(bf16), w_hh0,
                                    preferred_element_type=jnp.float32)
        h_new, c_new = lstm_cell(gates, cs[0])
        new_hs, new_cs = [h_new], [c_new]

        # Upper layers: the two per-layer dots merged into ONE MXU pass over
        # the stacked [W_ih; W_hh] weight (halves MXU pushes / MRF pops).
        for l in range(1, nl):
            hcat = jnp.concatenate([new_hs[l - 1], hs[l]], axis=-1).astype(bf16)
            gates = (jnp.dot(hcat, w_cat[l - 1],
                             preferred_element_type=jnp.float32) + b_up[l - 1])
            h_new, c_new = lstm_cell(gates, cs[l])
            new_hs.append(h_new)
            new_cs.append(c_new)

        # Prediction head: context projection + bias were folded into cnp in
        # the wrapper, so this is one dot + one lane-dense (Bb, 128) store.
        logits = (jnp.dot(new_hs[-1].astype(bf16), wph,
                          preferred_element_type=jnp.float32) + cnp_ref[t])
        logits_ref[t] = logits
        return tuple(new_hs), tuple(new_cs)

    init = (tuple(h_scr[l] for l in range(nl)),
            tuple(c_scr[l] for l in range(nl)))
    unroll = Tc if Tc <= 16 else 8
    fin_h, fin_c = lax.fori_loop(0, Tc, body, init, unroll=unroll)

    # ---- carry the LSTM state over to the next time chunk -------------------
    for l in range(nl):
        h_scr[l] = fin_h[l]
        c_scr[l] = fin_c[l]


def dkt_fused_forward(xg0, cn_proj, h0, c0, whh0, upper_ws, wph,
                      *, num_layers, hidden):
    """pallas_call wrapper: grid = (batch blocks [parallel], time chunks)."""
    L, Bp, G = xg0.shape
    NP = cn_proj.shape[-1]
    nl, H = num_layers, hidden

    # Time chunking bounds per-step VMEM and pipelines DMAs for long sequences
    # (required headroom on v7x's 64 MiB VMEM).
    Tc = L if L <= 128 else 64
    n_tc = -(-L // Tc)
    Lp = n_tc * Tc
    if Lp != L:
        pad = ((0, Lp - L), (0, 0), (0, 0))
        xg0 = jnp.pad(xg0, pad)
        cn_proj = jnp.pad(cn_proj, pad)

    # One batch block per TensorCore (v7x) once the padded batch is >= 16;
    # a single block otherwise (v5e/v6e have one TC, so no benefit there).
    n_blk = 2 if (Bp >= 16 and Bp % 16 == 0) else 1
    Bb = Bp // n_blk

    wspecs = [pl.BlockSpec(w.shape, lambda i, t: (0, 0))
              for w in (whh0, *upper_ws, wph)]
    in_specs = [
        pl.BlockSpec((Tc, Bb, G), lambda i, t: (t, i, 0)),    # xg0
        pl.BlockSpec((Tc, Bb, NP), lambda i, t: (t, i, 0)),   # cn_proj (+bias)
        pl.BlockSpec((nl, Bb, H), lambda i, t: (0, i, 0)),    # init h
        pl.BlockSpec((nl, Bb, H), lambda i, t: (0, i, 0)),    # init c
    ] + wspecs
    out_specs = pl.BlockSpec((Tc, Bb, NP), lambda i, t: (t, i, 0))

    kern = functools.partial(dkt_fused_kernel, num_layers=nl, hidden=H)
    logits = pl.pallas_call(
        kern,
        out_shape=jax.ShapeDtypeStruct((Lp, Bp, NP), jnp.float32),
        grid=(n_blk, n_tc),
        in_specs=in_specs,
        out_specs=out_specs,
        scratch_shapes=[pltpu.VMEM((nl, Bb, H), jnp.float32),   # carried h
                        pltpu.VMEM((nl, Bb, H), jnp.float32)],  # carried c
        compiler_params=pltpu.CompilerParams(
            dimension_semantics=("parallel", "arbitrary"),
            vmem_limit_bytes=32 * 1024 * 1024),
    )(xg0, cn_proj, h0, c0, whh0, *upper_ws, wph)
    return logits[:L]


# ----------------------------------------------------------------------------
# Model (parameters + forward)
# ----------------------------------------------------------------------------
def init_params(key, batch_size, seqlen, n_question, x_embed_dim, hidden_dim,
                hidden_layers):
    ks = jax.random.split(key, 5 + 3 * hidden_layers)
    kit = iter(ks)

    emb = 0.1 * jax.random.normal(next(kit), (2 * n_question + 1, x_embed_dim),
                                  jnp.float32)
    emb = emb.at[0].set(0.0)                       # padding_idx=0

    w_ih, w_hh, b_g = [], [], []
    d_in = x_embed_dim + 19
    for _ in range(hidden_layers):
        w_ih.append(0.1 * jax.random.normal(next(kit), (d_in, 4 * hidden_dim),
                                            jnp.float32))
        w_hh.append(0.1 * jax.random.normal(next(kit), (hidden_dim, 4 * hidden_dim),
                                            jnp.float32))
        b_g.append(0.1 * jax.random.normal(next(kit), (1, 4 * hidden_dim),
                                           jnp.float32))   # b_ih + b_hh combined
        d_in = hidden_dim

    w_pred = 0.1 * jax.random.normal(next(kit),
                                     (hidden_dim + 19, n_question + 1), jnp.float32)
    b_pred = jnp.zeros((1, n_question + 1), jnp.float32)

    C = jax.random.normal(next(kit), (batch_size, seqlen, 19), jnp.float32)

    init_h = jax.random.normal(next(kit), (hidden_layers, batch_size, hidden_dim),
                               jnp.float32)
    init_c = jax.random.normal(next(kit), (hidden_layers, batch_size, hidden_dim),
                               jnp.float32)

    return dict(emb=emb, w_ih=w_ih, w_hh=w_hh, b=b_g, w_pred=w_pred,
                b_pred=b_pred, C=C, init_h=init_h, init_c=init_c)


def model_forward(params, x_data, q_t_data, target,
                  repeated_time_gap, past_trail_counts, seq_time_gap,
                  n_question, hidden_layers):
    B, L = x_data.shape
    H = params['init_h'].shape[2]
    NQ1 = n_question + 1
    NP = max(128, ((NQ1 + 127) // 128) * 128)    # head padded to full lane tiles

    # c = cat([repeated_time_gap, seq_time_gap, past_trail_counts], dim=2)
    c = jnp.concatenate([repeated_time_gap, seq_time_gap, past_trail_counts],
                        axis=2)                               # (B, L+1, 19)
    c_t = params['C'] * c[:, :-1, :]                          # (B, L, 19)
    c_next = params['C'] * c[:, 1:, :]                        # (B, L, 19)

    x_emb = jnp.take(params['emb'], x_data, axis=0)           # (B, L, E)
    input_data = jnp.concatenate([x_emb, c_t], axis=2).astype(jnp.float32)

    # Layer-0 input projection hoisted out of the recurrence: one large
    # MXU-friendly matmul over all timesteps (time-major result).
    xg0 = (jnp.einsum('bld,dg->lbg', input_data, params['w_ih'][0])
           + params['b'][0])                                  # (L, B, 4H)

    # Prediction-head context projection + bias hoisted out of the recurrence,
    # zero-padded to NP lanes.
    cn_proj = (jnp.einsum('bld,dn->lbn', c_next.astype(jnp.float32),
                          params['w_pred'][H:, :])
               + params['b_pred'])                            # (L, B, NQ+1)
    cn_proj = jnp.pad(cn_proj, ((0, 0), (0, 0), (0, NP - NQ1)))

    bf16 = jnp.bfloat16
    wph = jnp.pad(params['w_pred'][:H, :],
                  ((0, 0), (0, NP - NQ1))).astype(bf16)       # (H, NP)
    whh0 = params['w_hh'][0].astype(bf16)
    upper_ws = []
    for l in range(1, hidden_layers):
        wcat = jnp.concatenate([params['w_ih'][l], params['w_hh'][l]],
                               axis=0).astype(bf16)           # (2H, 4H)
        upper_ws += [wcat, params['b'][l]]

    # Pad batch to a sublane-aligned multiple of 8: raises the M of every
    # per-step MXU pass; padded rows are sliced off afterwards.
    Bp = max(8, ((B + 7) // 8) * 8)
    pb = Bp - B
    if pb:
        xg0 = jnp.pad(xg0, ((0, 0), (0, pb), (0, 0)))
        cn_proj = jnp.pad(cn_proj, ((0, 0), (0, pb), (0, 0)))
        h0 = jnp.pad(params['init_h'], ((0, 0), (0, pb), (0, 0)))
        c0 = jnp.pad(params['init_c'], ((0, 0), (0, pb), (0, 0)))
    else:
        h0, c0 = params['init_h'], params['init_c']

    # TODO(synk): nn.Dropout is identity in inference mode; training-mode RNG
    # dropout is not reproduced here.
    logits_full = dkt_fused_forward(xg0, cn_proj, h0, c0, whh0, upper_ws, wph,
                                    num_layers=hidden_layers, hidden=H)

    # -------- tiny O(B*L) epilogue in XLA (off the serial critical path) -----
    logits = logits_full[:, :B, :NQ1]                         # (L, B, NQ+1)
    q_tm = q_t_data.reshape(B, L).T.astype(jnp.int32)         # (L, B)
    tgt_tm = target.reshape(B, L).astype(jnp.float32).T       # (L, B)

    sel = jnp.take_along_axis(logits, q_tm[:, :, None], axis=-1)[..., 0]  # (L,B)
    mask = q_tm > 0
    # numerically stable BCE-with-logits over the masked positions
    bce = (jnp.maximum(sel, 0.0) - sel * tgt_tm
           + jnp.log1p(jnp.exp(-jnp.abs(sel))))
    tot = jnp.sum(jnp.where(mask, bce, 0.0))
    cnt = jnp.sum(mask.astype(jnp.float32))
    # TODO(synk): PyTorch's mean over an empty masked_select would be NaN; we
    # return 0 for an all-masked batch instead.
    loss = tot / jnp.maximum(cnt, 1.0)

    sel_flat = sel.T.reshape(B * L)                           # batch-major flatten
    sigm = jax.nn.sigmoid(sel_flat)
    # TODO(synk): torch.masked_select produces a dynamic-shape tensor; here we
    # return the full per-position predictions/targets plus the boolean mask.
    return loss, sigm, target.astype(jnp.float32), (q_t_data > 0)


# ----------------------------------------------------------------------------
if __name__ == "__main__":
    batch_size, seqlen = 2, 8
    n_question, x_embed_dim, hidden_dim, hidden_layers = 20, 32, 32, 2

    key = jax.random.PRNGKey(0)
    kp, k1, k2, k3, k4, k5, k6 = jax.random.split(key, 7)

    params = init_params(kp, batch_size, seqlen, n_question, x_embed_dim,
                         hidden_dim, hidden_layers)

    x_data = jax.random.randint(k1, (batch_size, seqlen), 0, 2 * n_question + 1,
                                dtype=jnp.int32)
    q_t_data = jax.random.randint(k2, (batch_size * seqlen,), 0, n_question + 1,
                                  dtype=jnp.int32)
    target = jax.random.bernoulli(k3, 0.5, (batch_size * seqlen,)).astype(
        jnp.float32)
    repeated_time_gap = jax.random.uniform(k4, (batch_size, seqlen + 1, 7),
                                           dtype=jnp.float32)
    seq_time_gap = jax.random.uniform(k5, (batch_size, seqlen + 1, 6),
                                      dtype=jnp.float32)
    past_trail_counts = jax.random.uniform(k6, (batch_size, seqlen + 1, 6),
                                           dtype=jnp.float32)

    fwd = jax.jit(functools.partial(model_forward, n_question=n_question,
                                    hidden_layers=hidden_layers))
    loss, sigm_pred, tgt_out, mask = fwd(params, x_data, q_t_data, target,
                                         repeated_time_gap, past_trail_counts,
                                         seq_time_gap)

    jax.block_until_ready((loss, sigm_pred, tgt_out, mask))
    assert loss.shape == ()
    assert sigm_pred.shape == (batch_size * seqlen,)
    assert bool(jnp.isfinite(loss))
    assert bool(jnp.all(jnp.isfinite(sigm_pred)))
    print("KERNEL_OK")
</pallas_src>

<mosaic_0001>
module attributes {stable_mosaic.version = 11 : i64} {
  func.func @dkt_fused_kernel(%arg0: i32, %arg1: i32, %arg2: memref<8x8x128xf32, #tpu.memory_space<vmem>>, %arg3: memref<8x8x128xf32, #tpu.memory_space<vmem>>, %arg4: memref<2x8x32xf32, #tpu.memory_space<vmem>>, %arg5: memref<2x8x32xf32, #tpu.memory_space<vmem>>, %arg6: memref<32x128xbf16, #tpu.memory_space<vmem>>, %arg7: memref<64x128xbf16, #tpu.memory_space<vmem>>, %arg8: memref<1x128xf32, #tpu.memory_space<vmem>>, %arg9: memref<32x128xbf16, #tpu.memory_space<vmem>>, %arg10: memref<8x8x128xf32, #tpu.memory_space<vmem>>, %arg11: memref<2x8x32xf32, #tpu.memory_space<vmem>>, %arg12: memref<2x8x32xf32, #tpu.memory_space<vmem>>) attributes {dimension_semantics = [#tpu.dimension_semantics<parallel>, #tpu.dimension_semantics<arbitrary>], iteration_bounds = array<i64: 1, 1>, scalar_prefetch = 0 : i64, scratch_operands = 2 : i64, tpu.core_type = #tpu.core_type<tc>, window_params = [{transform_indices = @transform_0, window_bounds = array<i64: 8, 8, 128>}, {transform_indices = @transform_1, window_bounds = array<i64: 8, 8, 128>}, {transform_indices = @transform_2, window_bounds = array<i64: 2, 8, 32>}, {transform_indices = @transform_3, window_bounds = array<i64: 2, 8, 32>}, {pipeline_mode = #tpu.pipeline_mode<synchronous>, transform_indices = @transform_4, window_bounds = array<i64: 32, 128>}, {pipeline_mode = #tpu.pipeline_mode<synchronous>, transform_indices = @transform_5, window_bounds = array<i64: 64, 128>}, {pipeline_mode = #tpu.pipeline_mode<synchronous>, transform_indices = @transform_6, window_bounds = array<i64: 1, 128>}, {pipeline_mode = #tpu.pipeline_mode<synchronous>, transform_indices = @transform_7, window_bounds = array<i64: 32, 128>}, {transform_indices = @transform_8, window_bounds = array<i64: 8, 8, 128>}]} {
    %c0_i32 = arith.constant 0 : i32
    %0 = arith.cmpi eq, %arg1, %c0_i32 : i32
    %1 = arith.extui %0 : i1 to i32
    %c0_i32_0 = arith.constant 0 : i32
    %2 = arith.cmpi ne, %1, %c0_i32_0 : i32
    scf.if %2 {
      %c0_119 = arith.constant 0 : index
      %c0_120 = arith.constant 0 : index
      %c0_121 = arith.constant 0 : index
      %429 = vector.load %arg4[%c0_119, %c0_120, %c0_121] : memref<2x8x32xf32, #tpu.memory_space<vmem>>, vector<2x8x32xf32>
      %c0_122 = arith.constant 0 : index
      %c0_123 = arith.constant 0 : index
      %c0_124 = arith.constant 0 : index
      %430 = vector.load %arg11[%c0_122, %c0_123, %c0_124] : memref<2x8x32xf32, #tpu.memory_space<vmem>>, vector<2x8x32xf32>
      tpu.vector_store %arg11[%c0_122, %c0_123, %c0_124], %429 {strides = array<i32>} : memref<2x8x32xf32, #tpu.memory_space<vmem>>, vector<2x8x32xf32>,
      %c0_125 = arith.constant 0 : index
      %c0_126 = arith.constant 0 : index
      %c0_127 = arith.constant 0 : index
      %431 = vector.load %arg5[%c0_125, %c0_126, %c0_127] : memref<2x8x32xf32, #tpu.memory_space<vmem>>, vector<2x8x32xf32>
      %c0_128 = arith.constant 0 : index
      %c0_129 = arith.constant 0 : index
      %c0_130 = arith.constant 0 : index
      %432 = vector.load %arg12[%c0_128, %c0_129, %c0_130] : memref<2x8x32xf32, #tpu.memory_space<vmem>>, vector<2x8x32xf32>
      tpu.vector_store %arg12[%c0_128, %c0_129, %c0_130], %431 {strides = array<i32>} : memref<2x8x32xf32, #tpu.memory_space<vmem>>, vector<2x8x32xf32>,
    } else {
    }
    %c0 = arith.constant 0 : index
    %c0_1 = arith.constant 0 : index
    %3 = vector.load %arg6[%c0, %c0_1] : memref<32x128xbf16, #tpu.memory_space<vmem>>, vector<32x128xbf16>
    %c0_2 = arith.constant 0 : index
    %c0_3 = arith.constant 0 : index
    %4 = vector.load %arg7[%c0_2, %c0_3] : memref<64x128xbf16, #tpu.memory_space<vmem>>, vector<64x128xbf16>
    %c0_4 = arith.constant 0 : index
    %c0_5 = arith.constant 0 : index
    %5 = vector.load %arg8[%c0_4, %c0_5] : memref<1x128xf32, #tpu.memory_space<vmem>>, vector<1x128xf32>
    %6 = vector.shape_cast %5 : vector<1x128xf32> to vector<1x128xf32>
    %7 = vector.broadcast %6 : vector<1x128xf32> to vector<8x128xf32>
    %c0_6 = arith.constant 0 : index
    %c0_7 = arith.constant 0 : index
    %8 = vector.load %arg9[%c0_6, %c0_7] : memref<32x128xbf16, #tpu.memory_space<vmem>>, vector<32x128xbf16>
    %c0_8 = arith.constant 0 : index
    %c0_9 = arith.constant 0 : index
    %c0_10 = arith.constant 0 : index
    %9 = vector.load %arg11[%c0_8, %c0_9, %c0_10] : memref<2x8x32xf32, #tpu.memory_space<vmem>>, vector<1x8x32xf32>
    %10 = vector.shape_cast %9 : vector<1x8x32xf32> to vector<8x32xf32>
    %c1 = arith.constant 1 : index
    %c0_11 = arith.constant 0 : index
    %c0_12 = arith.constant 0 : index
    %11 = vector.load %arg11[%c1, %c0_11, %c0_12] : memref<2x8x32xf32, #tpu.memory_space<vmem>>, vector<1x8x32xf32>
    %12 = vector.shape_cast %11 : vector<1x8x32xf32> to vector<8x32xf32>
    %c0_13 = arith.constant 0 : index
    %c0_14 = arith.constant 0 : index
    %c0_15 = arith.constant 0 : index
    %13 = vector.load %arg12[%c0_13, %c0_14, %c0_15] : memref<2x8x32xf32, #tpu.memory_space<vmem>>, vector<1x8x32xf32>
    %14 = vector.shape_cast %13 : vector<1x8x32xf32> to vector<8x32xf32>
    %c1_16 = arith.constant 1 : index
    %c0_17 = arith.constant 0 : index
    %c0_18 = arith.constant 0 : index
    %15 = vector.load %arg12[%c1_16, %c0_17, %c0_18] : memref<2x8x32xf32, #tpu.memory_space<vmem>>, vector<1x8x32xf32>
    %16 = vector.shape_cast %15 : vector<1x8x32xf32> to vector<8x32xf32>
    %c0_i32_19 = arith.constant 0 : i32
    %17 = arith.index_cast %c0_i32_19 : i32 to index
    %c0_20 = arith.constant 0 : index
    %c0_21 = arith.constant 0 : index
    %18 = vector.load %arg2[%17, %c0_20, %c0_21] : memref<8x8x128xf32, #tpu.memory_space<vmem>>, vector<1x8x128xf32>
    %19 = vector.shape_cast %18 : vector<1x8x128xf32> to vector<8x128xf32>
    %20 = arith.truncf %10 : vector<8x32xf32> to vector<8x32xbf16>
    %cst = arith.constant dense<0.000000e+00> : vector<8x128xf32>
    %21 = tpu.matmul %20, %3, %cst {dimension_numbers = #tpu.dot_dimension_numbers<[1], [0], [0], [1], [0, 0, 1, 1], [], []>} : vector<8x32xbf16>, vector<32x128xbf16>, vector<8x128xf32> -> vector<8x128xf32>
    %22 = arith.addf %19, %21 : vector<8x128xf32>
    %23 = arith.negf %22 : vector<8x128xf32>
    %24 = math.exp %23 : vector<8x128xf32>
    %cst_22 = arith.constant 1.000000e+00 : f32
    %25 = vector.broadcast %cst_22 : f32 to vector<8x128xf32>
    %26 = arith.addf %25, %24 : vector<8x128xf32>
    %27 = arith.divf %25, %26 : vector<8x128xf32>
    %28 = math.tanh %22 : vector<8x128xf32>
    %29 = vector.extract_strided_slice %27 {offsets = [0, 0], sizes = [8, 32], strides = [1, 1]} : vector<8x128xf32> to vector<8x32xf32>
    %30 = vector.extract_strided_slice %27 {offsets = [0, 32], sizes = [8, 32], strides = [1, 1]} : vector<8x128xf32> to vector<8x32xf32>
    %31 = vector.extract_strided_slice %28 {offsets = [0, 64], sizes = [8, 32], strides = [1, 1]} : vector<8x128xf32> to vector<8x32xf32>
    %32 = vector.extract_strided_slice %27 {offsets = [0, 96], sizes = [8, 32], strides = [1, 1]} : vector<8x128xf32> to vector<8x32xf32>
    %33 = arith.mulf %30, %14 : vector<8x32xf32>
    %34 = arith.mulf %29, %31 : vector<8x32xf32>
    %35 = arith.addf %33, %34 : vector<8x32xf32>
    %36 = math.tanh %35 : vector<8x32xf32>
    %37 = arith.mulf %32, %36 : vector<8x32xf32>
    %38 = tpu.concatenate %37, %12 in 1 : vector<8x32xf32>, vector<8x32xf32> -> vector<8x64xf32>
    %39 = arith.truncf %38 : vector<8x64xf32> to vector<8x64xbf16>
    %cst_23 = arith.constant dense<0.000000e+00> : vector<8x128xf32>
    %40 = tpu.matmul %39, %4, %cst_23 {dimension_numbers = #tpu.dot_dimension_numbers<[1], [0], [0], [1], [0, 0, 1, 1], [], []>} : vector<8x64xbf16>, vector<64x128xbf16>, vector<8x128xf32> -> vector<8x128xf32>
    %41 = arith.addf %40, %7 : vector<8x128xf32>
    %42 = arith.negf %41 : vector<8x128xf32>
    %43 = math.exp %42 : vector<8x128xf32>
    %cst_24 = arith.constant 1.000000e+00 : f32
    %44 = vector.broadcast %cst_24 : f32 to vector<8x128xf32>
    %45 = arith.addf %44, %43 : vector<8x128xf32>
    %46 = arith.divf %44, %45 : vector<8x128xf32>
    %47 = math.tanh %41 : vector<8x128xf32>
    %48 = vector.extract_strided_slice %46 {offsets = [0, 0], sizes = [8, 32], strides = [1, 1]} : vector<8x128xf32> to vector<8x32xf32>
    %49 = vector.extract_strided_slice %46 {offsets = [0, 32], sizes = [8, 32], strides = [1, 1]} : vector<8x128xf32> to vector<8x32xf32>
    %50 = vector.extract_strided_slice %47 {offsets = [0, 64], sizes = [8, 32], strides = [1, 1]} : vector<8x128xf32> to vector<8x32xf32>
    %51 = vector.extract_strided_slice %46 {offsets = [0, 96], sizes = [8, 32], strides = [1, 1]} : vector<8x128xf32> to vector<8x32xf32>
    %52 = arith.mulf %49, %16 : vector<8x32xf32>
    %53 = arith.mulf %48, %50 : vector<8x32xf32>
    %54 = arith.addf %52, %53 : vector<8x32xf32>
    %55 = math.tanh %54 : vector<8x32xf32>
    %56 = arith.mulf %51, %55 : vector<8x32xf32>
    %57 = arith.truncf %56 : vector<8x32xf32> to vector<8x32xbf16>
    %cst_25 = arith.constant dense<0.000000e+00> : vector<8x128xf32>
    %58 = tpu.matmul %57, %8, %cst_25 {dimension_numbers = #tpu.dot_dimension_numbers<[1], [0], [0], [1], [0, 0, 1, 1], [], []>} : vector<8x32xbf16>, vector<32x128xbf16>, vector<8x128xf32> -> vector<8x128xf32>
    %59 = arith.index_cast %c0_i32_19 : i32 to index
    %c0_26 = arith.constant 0 : index
    %c0_27 = arith.constant 0 : index
    %60 = vector.load %arg3[%59, %c0_26, %c0_27] : memref<8x8x128xf32, #tpu.memory_space<vmem>>, vector<1x8x128xf32>
    %61 = vector.shape_cast %60 : vector<1x8x128xf32> to vector<8x128xf32>
    %62 = arith.addf %58, %61 : vector<8x128xf32>
    %63 = arith.index_cast %c0_i32_19 : i32 to index
    %c0_28 = arith.constant 0 : index
    %c0_29 = arith.constant 0 : index
    %64 = vector.load %arg10[%63, %c0_28, %c0_29] : memref<8x8x128xf32, #tpu.memory_space<vmem>>, vector<1x8x128xf32>
    %65 = vector.shape_cast %64 : vector<1x8x128xf32> to vector<8x128xf32>
    %66 = vector.shape_cast %62 : vector<8x128xf32> to vector<1x8x128xf32>
    tpu.vector_store %arg10[%63, %c0_28, %c0_29], %66 {strides = array<i32>} : memref<8x8x128xf32, #tpu.memory_space<vmem>>, vector<1x8x128xf32>,
    %c1_i32 = arith.constant 1 : i32
    %67 = arith.index_cast %c1_i32 : i32 to index
    %c0_30 = arith.constant 0 : index
    %c0_31 = arith.constant 0 : index
    %68 = vector.load %arg2[%67, %c0_30, %c0_31] : memref<8x8x128xf32, #tpu.memory_space<vmem>>, vector<1x8x128xf32>
    %69 = vector.shape_cast %68 : vector<1x8x128xf32> to vector<8x128xf32>
    %70 = arith.truncf %37 : vector<8x32xf32> to vector<8x32xbf16>
    %cst_32 = arith.constant dense<0.000000e+00> : vector<8x128xf32>
    %71 = tpu.matmul %70, %3, %cst_32 {dimension_numbers = #tpu.dot_dimension_numbers<[1], [0], [0], [1], [0, 0, 1, 1], [], []>} : vector<8x32xbf16>, vector<32x128xbf16>, vector<8x128xf32> -> vector<8x128xf32>
    %72 = arith.addf %69, %71 : vector<8x128xf32>
    %73 = arith.negf %72 : vector<8x128xf32>
    %74 = math.exp %73 : vector<8x128xf32>
    %cst_33 = arith.constant 1.000000e+00 : f32
    %75 = vector.broadcast %cst_33 : f32 to vector<8x128xf32>
    %76 = arith.addf %75, %74 : vector<8x128xf32>
    %77 = arith.divf %75, %76 : vector<8x128xf32>
    %78 = math.tanh %72 : vector<8x128xf32>
    %79 = vector.extract_strided_slice %77 {offsets = [0, 0], sizes = [8, 32], strides = [1, 1]} : vector<8x128xf32> to vector<8x32xf32>
    %80 = vector.extract_strided_slice %77 {offsets = [0, 32], sizes = [8, 32], strides = [1, 1]} : vector<8x128xf32> to vector<8x32xf32>
    %81 = vector.extract_strided_slice %78 {offsets = [0, 64], sizes = [8, 32], strides = [1, 1]} : vector<8x128xf32> to vector<8x32xf32>
    %82 = vector.extract_strided_slice %77 {offsets = [0, 96], sizes = [8, 32], strides = [1, 1]} : vector<8x128xf32> to vector<8x32xf32>
    %83 = arith.mulf %80, %35 : vector<8x32xf32>
    %84 = arith.mulf %79, %81 : vector<8x32xf32>
    %85 = arith.addf %83, %84 : vector<8x32xf32>
    %86 = math.tanh %85 : vector<8x32xf32>
    %87 = arith.mulf %82, %86 : vector<8x32xf32>
    %88 = tpu.concatenate %87, %56 in 1 : vector<8x32xf32>, vector<8x32xf32> -> vector<8x64xf32>
    %89 = arith.truncf %88 : vector<8x64xf32> to vector<8x64xbf16>
    %cst_34 = arith.constant dense<0.000000e+00> : vector<8x128xf32>
    %90 = tpu.matmul %89, %4, %cst_34 {dimension_numbers = #tpu.dot_dimension_numbers<[1], [0], [0], [1], [0, 0, 1, 1], [], []>} : vector<8x64xbf16>, vector<64x128xbf16>, vector<8x128xf32> -> vector<8x128xf32>
    %91 = arith.addf %90, %7 : vector<8x128xf32>
    %92 = arith.negf %91 : vector<8x128xf32>
    %93 = math.exp %92 : vector<8x128xf32>
    %cst_35 = arith.constant 1.000000e+00 : f32
    %94 = vector.broadcast %cst_35 : f32 to vector<8x128xf32>
    %95 = arith.addf %94, %93 : vector<8x128xf32>
    %96 = arith.divf %94, %95 : vector<8x128xf32>
    %97 = math.tanh %91 : vector<8x128xf32>
    %98 = vector.extract_strided_slice %96 {offsets = [0, 0], sizes = [8, 32], strides = [1, 1]} : vector<8x128xf32> to vector<8x32xf32>
    %99 = vector.extract_strided_slice %96 {offsets = [0, 32], sizes = [8, 32], strides = [1, 1]} : vector<8x128xf32> to vector<8x32xf32>
    %100 = vector.extract_strided_slice %97 {offsets = [0, 64], sizes = [8, 32], strides = [1, 1]} : vector<8x128xf32> to vector<8x32xf32>
    %101 = vector.extract_strided_slice %96 {offsets = [0, 96], sizes = [8, 32], strides = [1, 1]} : vector<8x128xf32> to vector<8x32xf32>
    %102 = arith.mulf %99, %54 : vector<8x32xf32>
    %103 = arith.mulf %98, %100 : vector<8x32xf32>
    %104 = arith.addf %102, %103 : vector<8x32xf32>
    %105 = math.tanh %104 : vector<8x32xf32>
    %106 = arith.mulf %101, %105 : vector<8x32xf32>
    %107 = arith.truncf %106 : vector<8x32xf32> to vector<8x32xbf16>
    %cst_36 = arith.constant dense<0.000000e+00> : vector<8x128xf32>
    %108 = tpu.matmul %107, %8, %cst_36 {dimension_numbers = #tpu.dot_dimension_numbers<[1], [0], [0], [1], [0, 0, 1, 1], [], []>} : vector<8x32xbf16>, vector<32x128xbf16>, vector<8x128xf32> -> vector<8x128xf32>
    %109 = arith.index_cast %c1_i32 : i32 to index
    %c0_37 = arith.constant 0 : index
    %c0_38 = arith.constant 0 : index
    %110 = vector.load %arg3[%109, %c0_37, %c0_38] : memref<8x8x128xf32, #tpu.memory_space<vmem>>, vector<1x8x128xf32>
    %111 = vector.shape_cast %110 : vector<1x8x128xf32> to vector<8x128xf32>
    %112 = arith.addf %108, %111 : vector<8x128xf32>
    %113 = arith.index_cast %c1_i32 : i32 to index
    %c0_39 = arith.constant 0 : index
    %c0_40 = arith.constant 0 : index
    %114 = vector.load %arg10[%113, %c0_39, %c0_40] : memref<8x8x128xf32, #tpu.memory_space<vmem>>, vector<1x8x128xf32>
    %115 = vector.shape_cast %114 : vector<1x8x128xf32> to vector<8x128xf32>
    %116 = vector.shape_cast %112 : vector<8x128xf32> to vector<1x8x128xf32>
    tpu.vector_store %arg10[%113, %c0_39, %c0_40], %116 {strides = array<i32>} : memref<8x8x128xf32, #tpu.memory_space<vmem>>, vector<1x8x128xf32>,
    %c2_i32 = arith.constant 2 : i32
    %117 = arith.index_cast %c2_i32 : i32 to index
    %c0_41 = arith.constant 0 : index
    %c0_42 = arith.constant 0 : index
    %118 = vector.load %arg2[%117, %c0_41, %c0_42] : memref<8x8x128xf32, #tpu.memory_space<vmem>>, vector<1x8x128xf32>
    %119 = vector.shape_cast %118 : vector<1x8x128xf32> to vector<8x128xf32>
    %120 = arith.truncf %87 : vector<8x32xf32> to vector<8x32xbf16>
    %cst_43 = arith.constant dense<0.000000e+00> : vector<8x128xf32>
    %121 = tpu.matmul %120, %3, %cst_43 {dimension_numbers = #tpu.dot_dimension_numbers<[1], [0], [0], [1], [0, 0, 1, 1], [], []>} : vector<8x32xbf16>, vector<32x128xbf16>, vector<8x128xf32> -> vector<8x128xf32>
    %122 = arith.addf %119, %121 : vector<8x128xf32>
    %123 = arith.negf %122 : vector<8x128xf32>
    %124 = math.exp %123 : vector<8x128xf32>
    %cst_44 = arith.constant 1.000000e+00 : f32
    %125 = vector.broadcast %cst_44 : f32 to vector<8x128xf32>
    %126 = arith.addf %125, %124 : vector<8x128xf32>
    %127 = arith.divf %125, %126 : vector<8x128xf32>
    %128 = math.tanh %122 : vector<8x128xf32>
    %129 = vector.extract_strided_slice %127 {offsets = [0, 0], sizes = [8, 32], strides = [1, 1]} : vector<8x128xf32> to vector<8x32xf32>
    %130 = vector.extract_strided_slice %127 {offsets = [0, 32], sizes = [8, 32], strides = [1, 1]} : vector<8x128xf32> to vector<8x32xf32>
    %131 = vector.extract_strided_slice %128 {offsets = [0, 64], sizes = [8, 32], strides = [1, 1]} : vector<8x128xf32> to vector<8x32xf32>
    %132 = vector.extract_strided_slice %127 {offsets = [0, 96], sizes = [8, 32], strides = [1, 1]} : vector<8x128xf32> to vector<8x32xf32>
    %133 = arith.mulf %130, %85 : vector<8x32xf32>
    %134 = arith.mulf %129, %131 : vector<8x32xf32>
    %135 = arith.addf %133, %134 : vector<8x32xf32>
    %136 = math.tanh %135 : vector<8x32xf32>
    %137 = arith.mulf %132, %136 : vector<8x32xf32>
    %138 = tpu.concatenate %137, %106 in 1 : vector<8x32xf32>, vector<8x32xf32> -> vector<8x64xf32>
    %139 = arith.truncf %138 : vector<8x64xf32> to vector<8x64xbf16>
    %cst_45 = arith.constant dense<0.000000e+00> : vector<8x128xf32>
    %140 = tpu.matmul %139, %4, %cst_45 {dimension_numbers = #tpu.dot_dimension_numbers<[1], [0], [0], [1], [0, 0, 1, 1], [], []>} : vector<8x64xbf16>, vector<64x128xbf16>, vector<8x128xf32> -> vector<8x128xf32>
    %141 = arith.addf %140, %7 : vector<8x128xf32>
    %142 = arith.negf %141 : vector<8x128xf32>
    %143 = math.exp %142 : vector<8x128xf32>
    %cst_46 = arith.constant 1.000000e+00 : f32
    %144 = vector.broadcast %cst_46 : f32 to vector<8x128xf32>
    %145 = arith.addf %144, %143 : vector<8x128xf32>
    %146 = arith.divf %144, %145 : vector<8x128xf32>
    %147 = math.tanh %141 : vector<8x128xf32>
    %148 = vector.extract_strided_slice %146 {offsets = [0, 0], sizes = [8, 32], strides = [1, 1]} : vector<8x128xf32> to vector<8x32xf32>
    %149 = vector.extract_strided_slice %146 {offsets = [0, 32], sizes = [8, 32], strides = [1, 1]} : vector<8x128xf32> to vector<8x32xf32>
    %150 = vector.extract_strided_slice %147 {offsets = [0, 64], sizes = [8, 32], strides = [1, 1]} : vector<8x128xf32> to vector<8x32xf32>
    %151 = vector.extract_strided_slice %146 {offsets = [0, 96], sizes = [8, 32], strides = [1, 1]} : vector<8x128xf32> to vector<8x32xf32>
    %152 = arith.mulf %149, %104 : vector<8x32xf32>
    %153 = arith.mulf %148, %150 : vector<8x32xf32>
    %154 = arith.addf %152, %153 : vector<8x32xf32>
    %155 = math.tanh %154 : vector<8x32xf32>
    %156 = arith.mulf %151, %155 : vector<8x32xf32>
    %157 = arith.truncf %156 : vector<8x32xf32> to vector<8x32xbf16>
    %cst_47 = arith.constant dense<0.000000e+00> : vector<8x128xf32>
    %158 = tpu.matmul %157, %8, %cst_47 {dimension_numbers = #tpu.dot_dimension_numbers<[1], [0], [0], [1], [0, 0, 1, 1], [], []>} : vector<8x32xbf16>, vector<32x128xbf16>, vector<8x128xf32> -> vector<8x128xf32>
    %159 = arith.index_cast %c2_i32 : i32 to index
    %c0_48 = arith.constant 0 : index
    %c0_49 = arith.constant 0 : index
    %160 = vector.load %arg3[%159, %c0_48, %c0_49] : memref<8x8x128xf32, #tpu.memory_space<vmem>>, vector<1x8x128xf32>
    %161 = vector.shape_cast %160 : vector<1x8x128xf32> to vector<8x128xf32>
    %162 = arith.addf %158, %161 : vector<8x128xf32>
    %163 = arith.index_cast %c2_i32 : i32 to index
    %c0_50 = arith.constant 0 : index
    %c0_51 = arith.constant 0 : index
    %164 = vector.load %arg10[%163, %c0_50, %c0_51] : memref<8x8x128xf32, #tpu.memory_space<vmem>>, vector<1x8x128xf32>
    %165 = vector.shape_cast %164 : vector<1x8x128xf32> to vector<8x128xf32>
    %166 = vector.shape_cast %162 : vector<8x128xf32> to vector<1x8x128xf32>
    tpu.vector_store %arg10[%163, %c0_50, %c0_51], %166 {strides = array<i32>} : memref<8x8x128xf32, #tpu.memory_space<vmem>>, vector<1x8x128xf32>,
    %c3_i32 = arith.constant 3 : i32
    %167 = arith.index_cast %c3_i32 : i32 to index
    %c0_52 = arith.constant 0 : index
    %c0_53 = arith.constant 0 : index
    %168 = vector.load %arg2[%167, %c0_52, %c0_53] : memref<8x8x128xf32, #tpu.memory_space<vmem>>, vector<1x8x128xf32>
    %169 = vector.shape_cast %168 : vector<1x8x128xf32> to vector<8x128xf32>
    %170 = arith.truncf %137 : vector<8x32xf32> to vector<8x32xbf16>
    %cst_54 = arith.constant dense<0.000000e+00> : vector<8x128xf32>
    %171 = tpu.matmul %170, %3, %cst_54 {dimension_numbers = #tpu.dot_dimension_numbers<[1], [0], [0], [1], [0, 0, 1, 1], [], []>} : vector<8x32xbf16>, vector<32x128xbf16>, vector<8x128xf32> -> vector<8x128xf32>
    %172 = arith.addf %169, %171 : vector<8x128xf32>
    %173 = arith.negf %172 : vector<8x128xf32>
    %174 = math.exp %173 : vector<8x128xf32>
    %cst_55 = arith.constant 1.000000e+00 : f32
    %175 = vector.broadcast %cst_55 : f32 to vector<8x128xf32>
    %176 = arith.addf %175, %174 : vector<8x128xf32>
    %177 = arith.divf %175, %176 : vector<8x128xf32>
    %178 = math.tanh %172 : vector<8x128xf32>
    %179 = vector.extract_strided_slice %177 {offsets = [0, 0], sizes = [8, 32], strides = [1, 1]} : vector<8x128xf32> to vector<8x32xf32>
    %180 = vector.extract_strided_slice %177 {offsets = [0, 32], sizes = [8, 32], strides = [1, 1]} : vector<8x128xf32> to vector<8x32xf32>
    %181 = vector.extract_strided_slice %178 {offsets = [0, 64], sizes = [8, 32], strides = [1, 1]} : vector<8x128xf32> to vector<8x32xf32>
    %182 = vector.extract_strided_slice %177 {offsets = [0, 96], sizes = [8, 32], strides = [1, 1]} : vector<8x128xf32> to vector<8x32xf32>
    %183 = arith.mulf %180, %135 : vector<8x32xf32>
    %184 = arith.mulf %179, %181 : vector<8x32xf32>
    %185 = arith.addf %183, %184 : vector<8x32xf32>
    %186 = math.tanh %185 : vector<8x32xf32>
    %187 = arith.mulf %182, %186 : vector<8x32xf32>
    %188 = tpu.concatenate %187, %156 in 1 : vector<8x32xf32>, vector<8x32xf32> -> vector<8x64xf32>
    %189 = arith.truncf %188 : vector<8x64xf32> to vector<8x64xbf16>
    %cst_56 = arith.constant dense<0.000000e+00> : vector<8x128xf32>
    %190 = tpu.matmul %189, %4, %cst_56 {dimension_numbers = #tpu.dot_dimension_numbers<[1], [0], [0], [1], [0, 0, 1, 1], [], []>} : vector<8x64xbf16>, vector<64x128xbf16>, vector<8x128xf32> -> vector<8x128xf32>
    %191 = arith.addf %190, %7 : vector<8x128xf32>
    %192 = arith.negf %191 : vector<8x128xf32>
    %193 = math.exp %192 : vector<8x128xf32>
    %cst_57 = arith.constant 1.000000e+00 : f32
    %194 = vector.broadcast %cst_57 : f32 to vector<8x128xf32>
    %195 = arith.addf %194, %193 : vector<8x128xf32>
    %196 = arith.divf %194, %195 : vector<8x128xf32>
    %197 = math.tanh %191 : vector<8x128xf32>
    %198 = vector.extract_strided_slice %196 {offsets = [0, 0], sizes = [8, 32], strides = [1, 1]} : vector<8x128xf32> to vector<8x32xf32>
    %199 = vector.extract_strided_slice %196 {offsets = [0, 32], sizes = [8, 32], strides = [1, 1]} : vector<8x128xf32> to vector<8x32xf32>
    %200 = vector.extract_strided_slice %197 {offsets = [0, 64], sizes = [8, 32], strides = [1, 1]} : vector<8x128xf32> to vector<8x32xf32>
    %201 = vector.extract_strided_slice %196 {offsets = [0, 96], sizes = [8, 32], strides = [1, 1]} : vector<8x128xf32> to vector<8x32xf32>
    %202 = arith.mulf %199, %154 : vector<8x32xf32>
    %203 = arith.mulf %198, %200 : vector<8x32xf32>
    %204 = arith.addf %202, %203 : vector<8x32xf32>
    %205 = math.tanh %204 : vector<8x32xf32>
    %206 = arith.mulf %201, %205 : vector<8x32xf32>
    %207 = arith.truncf %206 : vector<8x32xf32> to vector<8x32xbf16>
    %cst_58 = arith.constant dense<0.000000e+00> : vector<8x128xf32>
    %208 = tpu.matmul %207, %8, %cst_58 {dimension_numbers = #tpu.dot_dimension_numbers<[1], [0], [0], [1], [0, 0, 1, 1], [], []>} : vector<8x32xbf16>, vector<32x128xbf16>, vector<8x128xf32> -> vector<8x128xf32>
    %209 = arith.index_cast %c3_i32 : i32 to index
    %c0_59 = arith.constant 0 : index
    %c0_60 = arith.constant 0 : index
    %210 = vector.load %arg3[%209, %c0_59, %c0_60] : memref<8x8x128xf32, #tpu.memory_space<vmem>>, vector<1x8x128xf32>
    %211 = vector.shape_cast %210 : vector<1x8x128xf32> to vector<8x128xf32>
    %212 = arith.addf %208, %211 : vector<8x128xf32>
    %213 = arith.index_cast %c3_i32 : i32 to index
    %c0_61 = arith.constant 0 : index
    %c0_62 = arith.constant 0 : index
    %214 = vector.load %arg10[%213, %c0_61, %c0_62] : memref<8x8x128xf32, #tpu.memory_space<vmem>>, vector<1x8x128xf32>
    %215 = vector.shape_cast %214 : vector<1x8x128xf32> to vector<8x128xf32>
    %216 = vector.shape_cast %212 : vector<8x128xf32> to vector<1x8x128xf32>
    tpu.vector_store %arg10[%213, %c0_61, %c0_62], %216 {strides = array<i32>} : memref<8x8x128xf32, #tpu.memory_space<vmem>>, vector<1x8x128xf32>,
    %c4_i32 = arith.constant 4 : i32
    %217 = arith.index_cast %c4_i32 : i32 to index
    %c0_63 = arith.constant 0 : index
    %c0_64 = arith.constant 0 : index
    %218 = vector.load %arg2[%217, %c0_63, %c0_64] : memref<8x8x128xf32, #tpu.memory_space<vmem>>, vector<1x8x128xf32>
    %219 = vector.shape_cast %218 : vector<1x8x128xf32> to vector<8x128xf32>
    %220 = arith.truncf %187 : vector<8x32xf32> to vector<8x32xbf16>
    %cst_65 = arith.constant dense<0.000000e+00> : vector<8x128xf32>
    %221 = tpu.matmul %220, %3, %cst_65 {dimension_numbers = #tpu.dot_dimension_numbers<[1], [0], [0], [1], [0, 0, 1, 1], [], []>} : vector<8x32xbf16>, vector<32x128xbf16>, vector<8x128xf32> -> vector<8x128xf32>
    %222 = arith.addf %219, %221 : vector<8x128xf32>
    %223 = arith.negf %222 : vector<8x128xf32>
    %224 = math.exp %223 : vector<8x128xf32>
    %cst_66 = arith.constant 1.000000e+00 : f32
    %225 = vector.broadcast %cst_66 : f32 to vector<8x128xf32>
    %226 = arith.addf %225, %224 : vector<8x128xf32>
    %227 = arith.divf %225, %226 : vector<8x128xf32>
    %228 = math.tanh %222 : vector<8x128xf32>
    %229 = vector.extract_strided_slice %227 {offsets = [0, 0], sizes = [8, 32], strides = [1, 1]} : vector<8x128xf32> to vector<8x32xf32>
    %230 = vector.extract_strided_slice %227 {offsets = [0, 32], sizes = [8, 32], strides = [1, 1]} : vector<8x128xf32> to vector<8x32xf32>
    %231 = vector.extract_strided_slice %228 {offsets = [0, 64], sizes = [8, 32], strides = [1, 1]} : vector<8x128xf32> to vector<8x32xf32>
    %232 = vector.extract_strided_slice %227 {offsets = [0, 96], sizes = [8, 32], strides = [1, 1]} : vector<8x128xf32> to vector<8x32xf32>
    %233 = arith.mulf %230, %185 : vector<8x32xf32>
    %234 = arith.mulf %229, %231 : vector<8x32xf32>
    %235 = arith.addf %233, %234 : vector<8x32xf32>
    %236 = math.tanh %235 : vector<8x32xf32>
    %237 = arith.mulf %232, %236 : vector<8x32xf32>
    %238 = tpu.concatenate %237, %206 in 1 : vector<8x32xf32>, vector<8x32xf32> -> vector<8x64xf32>
    %239 = arith.truncf %238 : vector<8x64xf32> to vector<8x64xbf16>
    %cst_67 = arith.constant dense<0.000000e+00> : vector<8x128xf32>
    %240 = tpu.matmul %239, %4, %cst_67 {dimension_numbers = #tpu.dot_dimension_numbers<[1], [0], [0], [1], [0, 0, 1, 1], [], []>} : vector<8x64xbf16>, vector<64x128xbf16>, vector<8x128xf32> -> vector<8x128xf32>
    %241 = arith.addf %240, %7 : vector<8x128xf32>
    %242 = arith.negf %241 : vector<8x128xf32>
    %243 = math.exp %242 : vector<8x128xf32>
    %cst_68 = arith.constant 1.000000e+00 : f32
    %244 = vector.broadcast %cst_68 : f32 to vector<8x128xf32>
    %245 = arith.addf %244, %243 : vector<8x128xf32>
    %246 = arith.divf %244, %245 : vector<8x128xf32>
    %247 = math.tanh %241 : vector<8x128xf32>
    %248 = vector.extract_strided_slice %246 {offsets = [0, 0], sizes = [8, 32], strides = [1, 1]} : vector<8x128xf32> to vector<8x32xf32>
    %249 = vector.extract_strided_slice %246 {offsets = [0, 32], sizes = [8, 32], strides = [1, 1]} : vector<8x128xf32> to vector<8x32xf32>
    %250 = vector.extract_strided_slice %247 {offsets = [0, 64], sizes = [8, 32], strides = [1, 1]} : vector<8x128xf32> to vector<8x32xf32>
    %251 = vector.extract_strided_slice %246 {offsets = [0, 96], sizes = [8, 32], strides = [1, 1]} : vector<8x128xf32> to vector<8x32xf32>
    %252 = arith.mulf %249, %204 : vector<8x32xf32>
    %253 = arith.mulf %248, %250 : vector<8x32xf32>
    %254 = arith.addf %252, %253 : vector<8x32xf32>
    %255 = math.tanh %254 : vector<8x32xf32>
    %256 = arith.mulf %251, %255 : vector<8x32xf32>
    %257 = arith.truncf %256 : vector<8x32xf32> to vector<8x32xbf16>
    %cst_69 = arith.constant dense<0.000000e+00> : vector<8x128xf32>
    %258 = tpu.matmul %257, %8, %cst_69 {dimension_numbers = #tpu.dot_dimension_numbers<[1], [0], [0], [1], [0, 0, 1, 1], [], []>} : vector<8x32xbf16>, vector<32x128xbf16>, vector<8x128xf32> -> vector<8x128xf32>
    %259 = arith.index_cast %c4_i32 : i32 to index
    %c0_70 = arith.constant 0 : index
    %c0_71 = arith.constant 0 : index
    %260 = vector.load %arg3[%259, %c0_70, %c0_71] : memref<8x8x128xf32, #tpu.memory_space<vmem>>, vector<1x8x128xf32>
    %261 = vector.shape_cast %260 : vector<1x8x128xf32> to vector<8x128xf32>
    %262 = arith.addf %258, %261 : vector<8x128xf32>
    %263 = arith.index_cast %c4_i32 : i32 to index
    %c0_72 = arith.constant 0 : index
    %c0_73 = arith.constant 0 : index
    %264 = vector.load %arg10[%263, %c0_72, %c0_73] : memref<8x8x128xf32, #tpu.memory_space<vmem>>, vector<1x8x128xf32>
    %265 = vector.shape_cast %264 : vector<1x8x128xf32> to vector<8x128xf32>
    %266 = vector.shape_cast %262 : vector<8x128xf32> to vector<1x8x128xf32>
    tpu.vector_store %arg10[%263, %c0_72, %c0_73], %266 {strides = array<i32>} : memref<8x8x128xf32, #tpu.memory_space<vmem>>, vector<1x8x128xf32>,
    %c5_i32 = arith.constant 5 : i32
    %267 = arith.index_cast %c5_i32 : i32 to index
    %c0_74 = arith.constant 0 : index
    %c0_75 = arith.constant 0 : index
    %268 = vector.load %arg2[%267, %c0_74, %c0_75] : memref<8x8x128xf32, #tpu.memory_space<vmem>>, vector<1x8x128xf32>
    %269 = vector.shape_cast %268 : vector<1x8x128xf32> to vector<8x128xf32>
    %270 = arith.truncf %237 : vector<8x32xf32> to vector<8x32xbf16>
    %cst_76 = arith.constant dense<0.000000e+00> : vector<8x128xf32>
    %271 = tpu.matmul %270, %3, %cst_76 {dimension_numbers = #tpu.dot_dimension_numbers<[1], [0], [0], [1], [0, 0, 1, 1], [], []>} : vector<8x32xbf16>, vector<32x128xbf16>, vector<8x128xf32> -> vector<8x128xf32>
    %272 = arith.addf %269, %271 : vector<8x128xf32>
    %273 = arith.negf %272 : vector<8x128xf32>
    %274 = math.exp %273 : vector<8x128xf32>
    %cst_77 = arith.constant 1.000000e+00 : f32
    %275 = vector.broadcast %cst_77 : f32 to vector<8x128xf32>
    %276 = arith.addf %275, %274 : vector<8x128xf32>
    %277 = arith.divf %275, %276 : vector<8x128xf32>
    %278 = math.tanh %272 : vector<8x128xf32>
    %279 = vector.extract_strided_slice %277 {offsets = [0, 0], sizes = [8, 32], strides = [1, 1]} : vector<8x128xf32> to vector<8x32xf32>
    %280 = vector.extract_strided_slice %277 {offsets = [0, 32], sizes = [8, 32], strides = [1, 1]} : vector<8x128xf32> to vector<8x32xf32>
    %281 = vector.extract_strided_slice %278 {offsets = [0, 64], sizes = [8, 32], strides = [1, 1]} : vector<8x128xf32> to vector<8x32xf32>
    %282 = vector.extract_strided_slice %277 {offsets = [0, 96], sizes = [8, 32], strides = [1, 1]} : vector<8x128xf32> to vector<8x32xf32>
    %283 = arith.mulf %280, %235 : vector<8x32xf32>
    %284 = arith.mulf %279, %281 : vector<8x32xf32>
    %285 = arith.addf %283, %284 : vector<8x32xf32>
    %286 = math.tanh %285 : vector<8x32xf32>
    %287 = arith.mulf %282, %286 : vector<8x32xf32>
    %288 = tpu.concatenate %287, %256 in 1 : vector<8x32xf32>, vector<8x32xf32> -> vector<8x64xf32>
    %289 = arith.truncf %288 : vector<8x64xf32> to vector<8x64xbf16>
    %cst_78 = arith.constant dense<0.000000e+00> : vector<8x128xf32>
    %290 = tpu.matmul %289, %4, %cst_78 {dimension_numbers = #tpu.dot_dimension_numbers<[1], [0], [0], [1], [0, 0, 1, 1], [], []>} : vector<8x64xbf16>, vector<64x128xbf16>, vector<8x128xf32> -> vector<8x128xf32>
    %291 = arith.addf %290, %7 : vector<8x128xf32>
    %292 = arith.negf %291 : vector<8x128xf32>
    %293 = math.exp %292 : vector<8x128xf32>
    %cst_79 = arith.constant 1.000000e+00 : f32
    %294 = vector.broadcast %cst_79 : f32 to vector<8x128xf32>
    %295 = arith.addf %294, %293 : vector<8x128xf32>
    %296 = arith.divf %294, %295 : vector<8x128xf32>
    %297 = math.tanh %291 : vector<8x128xf32>
    %298 = vector.extract_strided_slice %296 {offsets = [0, 0], sizes = [8, 32], strides = [1, 1]} : vector<8x128xf32> to vector<8x32xf32>
    %299 = vector.extract_strided_slice %296 {offsets = [0, 32], sizes = [8, 32], strides = [1, 1]} : vector<8x128xf32> to vector<8x32xf32>
    %300 = vector.extract_strided_slice %297 {offsets = [0, 64], sizes = [8, 32], strides = [1, 1]} : vector<8x128xf32> to vector<8x32xf32>
    %301 = vector.extract_strided_slice %296 {offsets = [0, 96], sizes = [8, 32], strides = [1, 1]} : vector<8x128xf32> to vector<8x32xf32>
    %302 = arith.mulf %299, %254 : vector<8x32xf32>
    %303 = arith.mulf %298, %300 : vector<8x32xf32>
    %304 = arith.addf %302, %303 : vector<8x32xf32>
    %305 = math.tanh %304 : vector<8x32xf32>
    %306 = arith.mulf %301, %305 : vector<8x32xf32>
    %307 = arith.truncf %306 : vector<8x32xf32> to vector<8x32xbf16>
    %cst_80 = arith.constant dense<0.000000e+00> : vector<8x128xf32>
    %308 = tpu.matmul %307, %8, %cst_80 {dimension_numbers = #tpu.dot_dimension_numbers<[1], [0], [0], [1], [0, 0, 1, 1], [], []>} : vector<8x32xbf16>, vector<32x128xbf16>, vector<8x128xf32> -> vector<8x128xf32>
    %309 = arith.index_cast %c5_i32 : i32 to index
    %c0_81 = arith.constant 0 : index
    %c0_82 = arith.constant 0 : index
    %310 = vector.load %arg3[%309, %c0_81, %c0_82] : memref<8x8x128xf32, #tpu.memory_space<vmem>>, vector<1x8x128xf32>
    %311 = vector.shape_cast %310 : vector<1x8x128xf32> to vector<8x128xf32>
    %312 = arith.addf %308, %311 : vector<8x128xf32>
    %313 = arith.index_cast %c5_i32 : i32 to index
    %c0_83 = arith.constant 0 : index
    %c0_84 = arith.constant 0 : index
    %314 = vector.load %arg10[%313, %c0_83, %c0_84] : memref<8x8x128xf32, #tpu.memory_space<vmem>>, vector<1x8x128xf32>
    %315 = vector.shape_cast %314 : vector<1x8x128xf32> to vector<8x128xf32>
    %316 = vector.shape_cast %312 : vector<8x128xf32> to vector<1x8x128xf32>
    tpu.vector_store %arg10[%313, %c0_83, %c0_84], %316 {strides = array<i32>} : memref<8x8x128xf32, #tpu.memory_space<vmem>>, vector<1x8x128xf32>,
    %c6_i32 = arith.constant 6 : i32
    %317 = arith.index_cast %c6_i32 : i32 to index
    %c0_85 = arith.constant 0 : index
    %c0_86 = arith.constant 0 : index
    %318 = vector.load %arg2[%317, %c0_85, %c0_86] : memref<8x8x128xf32, #tpu.memory_space<vmem>>, vector<1x8x128xf32>
    %319 = vector.shape_cast %318 : vector<1x8x128xf32> to vector<8x128xf32>
    %320 = arith.truncf %287 : vector<8x32xf32> to vector<8x32xbf16>
    %cst_87 = arith.constant dense<0.000000e+00> : vector<8x128xf32>
    %321 = tpu.matmul %320, %3, %cst_87 {dimension_numbers = #tpu.dot_dimension_numbers<[1], [0], [0], [1], [0, 0, 1, 1], [], []>} : vector<8x32xbf16>, vector<32x128xbf16>, vector<8x128xf32> -> vector<8x128xf32>
    %322 = arith.addf %319, %321 : vector<8x128xf32>
    %323 = arith.negf %322 : vector<8x128xf32>
    %324 = math.exp %323 : vector<8x128xf32>
    %cst_88 = arith.constant 1.000000e+00 : f32
    %325 = vector.broadcast %cst_88 : f32 to vector<8x128xf32>
    %326 = arith.addf %325, %324 : vector<8x128xf32>
    %327 = arith.divf %325, %326 : vector<8x128xf32>
    %328 = math.tanh %322 : vector<8x128xf32>
    %329 = vector.extract_strided_slice %327 {offsets = [0, 0], sizes = [8, 32], strides = [1, 1]} : vector<8x128xf32> to vector<8x32xf32>
    %330 = vector.extract_strided_slice %327 {offsets = [0, 32], sizes = [8, 32], strides = [1, 1]} : vector<8x128xf32> to vector<8x32xf32>
    %331 = vector.extract_strided_slice %328 {offsets = [0, 64], sizes = [8, 32], strides = [1, 1]} : vector<8x128xf32> to vector<8x32xf32>
    %332 = vector.extract_strided_slice %327 {offsets = [0, 96], sizes = [8, 32], strides = [1, 1]} : vector<8x128xf32> to vector<8x32xf32>
    %333 = arith.mulf %330, %285 : vector<8x32xf32>
    %334 = arith.mulf %329, %331 : vector<8x32xf32>
    %335 = arith.addf %333, %334 : vector<8x32xf32>
    %336 = math.tanh %335 : vector<8x32xf32>
    %337 = arith.mulf %332, %336 : vector<8x32xf32>
    %338 = tpu.concatenate %337, %306 in 1 : vector<8x32xf32>, vector<8x32xf32> -> vector<8x64xf32>
    %339 = arith.truncf %338 : vector<8x64xf32> to vector<8x64xbf16>
    %cst_89 = arith.constant dense<0.000000e+00> : vector<8x128xf32>
    %340 = tpu.matmul %339, %4, %cst_89 {dimension_numbers = #tpu.dot_dimension_numbers<[1], [0], [0], [1], [0, 0, 1, 1], [], []>} : vector<8x64xbf16>, vector<64x128xbf16>, vector<8x128xf32> -> vector<8x128xf32>
    %341 = arith.addf %340, %7 : vector<8x128xf32>
    %342 = arith.negf %341 : vector<8x128xf32>
    %343 = math.exp %342 : vector<8x128xf32>
    %cst_90 = arith.constant 1.000000e+00 : f32
    %344 = vector.broadcast %cst_90 : f32 to vector<8x128xf32>
    %345 = arith.addf %344, %343 : vector<8x128xf32>
    %346 = arith.divf %344, %345 : vector<8x128xf32>
    %347 = math.tanh %341 : vector<8x128xf32>
    %348 = vector.extract_strided_slice %346 {offsets = [0, 0], sizes = [8, 32], strides = [1, 1]} : vector<8x128xf32> to vector<8x32xf32>
    %349 = vector.extract_strided_slice %346 {offsets = [0, 32], sizes = [8, 32], strides = [1, 1]} : vector<8x128xf32> to vector<8x32xf32>
    %350 = vector.extract_strided_slice %347 {offsets = [0, 64], sizes = [8, 32], strides = [1, 1]} : vector<8x128xf32> to vector<8x32xf32>
    %351 = vector.extract_strided_slice %346 {offsets = [0, 96], sizes = [8, 32], strides = [1, 1]} : vector<8x128xf32> to vector<8x32xf32>
    %352 = arith.mulf %349, %304 : vector<8x32xf32>
    %353 = arith.mulf %348, %350 : vector<8x32xf32>
    %354 = arith.addf %352, %353 : vector<8x32xf32>
    %355 = math.tanh %354 : vector<8x32xf32>
    %356 = arith.mulf %351, %355 : vector<8x32xf32>
    %357 = arith.truncf %356 : vector<8x32xf32> to vector<8x32xbf16>
    %cst_91 = arith.constant dense<0.000000e+00> : vector<8x128xf32>
    %358 = tpu.matmul %357, %8, %cst_91 {dimension_numbers = #tpu.dot_dimension_numbers<[1], [0], [0], [1], [0, 0, 1, 1], [], []>} : vector<8x32xbf16>, vector<32x128xbf16>, vector<8x128xf32> -> vector<8x128xf32>
    %359 = arith.index_cast %c6_i32 : i32 to index
    %c0_92 = arith.constant 0 : index
    %c0_93 = arith.constant 0 : index
    %360 = vector.load %arg3[%359, %c0_92, %c0_93] : memref<8x8x128xf32, #tpu.memory_space<vmem>>, vector<1x8x128xf32>
    %361 = vector.shape_cast %360 : vector<1x8x128xf32> to vector<8x128xf32>
    %362 = arith.addf %358, %361 : vector<8x128xf32>
    %363 = arith.index_cast %c6_i32 : i32 to index
    %c0_94 = arith.constant 0 : index
    %c0_95 = arith.constant 0 : index
    %364 = vector.load %arg10[%363, %c0_94, %c0_95] : memref<8x8x128xf32, #tpu.memory_space<vmem>>, vector<1x8x128xf32>
    %365 = vector.shape_cast %364 : vector<1x8x128xf32> to vector<8x128xf32>
    %366 = vector.shape_cast %362 : vector<8x128xf32> to vector<1x8x128xf32>
    tpu.vector_store %arg10[%363, %c0_94, %c0_95], %366 {strides = array<i32>} : memref<8x8x128xf32, #tpu.memory_space<vmem>>, vector<1x8x128xf32>,
    %c7_i32 = arith.constant 7 : i32
    %367 = arith.index_cast %c7_i32 : i32 to index
    %c0_96 = arith.constant 0 : index
    %c0_97 = arith.constant 0 : index
    %368 = vector.load %arg2[%367, %c0_96, %c0_97] : memref<8x8x128xf32, #tpu.memory_space<vmem>>, vector<1x8x128xf32>
    %369 = vector.shape_cast %368 : vector<1x8x128xf32> to vector<8x128xf32>
    %370 = arith.truncf %337 : vector<8x32xf32> to vector<8x32xbf16>
    %cst_98 = arith.constant dense<0.000000e+00> : vector<8x128xf32>
    %371 = tpu.matmul %370, %3, %cst_98 {dimension_numbers = #tpu.dot_dimension_numbers<[1], [0], [0], [1], [0, 0, 1, 1], [], []>} : vector<8x32xbf16>, vector<32x128xbf16>, vector<8x128xf32> -> vector<8x128xf32>
    %372 = arith.addf %369, %371 : vector<8x128xf32>
    %373 = arith.negf %372 : vector<8x128xf32>
    %374 = math.exp %373 : vector<8x128xf32>
    %cst_99 = arith.constant 1.000000e+00 : f32
    %375 = vector.broadcast %cst_99 : f32 to vector<8x128xf32>
    %376 = arith.addf %375, %374 : vector<8x128xf32>
    %377 = arith.divf %375, %376 : vector<8x128xf32>
    %378 = math.tanh %372 : vector<8x128xf32>
    %379 = vector.extract_strided_slice %377 {offsets = [0, 0], sizes = [8, 32], strides = [1, 1]} : vector<8x128xf32> to vector<8x32xf32>
    %380 = vector.extract_strided_slice %377 {offsets = [0, 32], sizes = [8, 32], strides = [1, 1]} : vector<8x128xf32> to vector<8x32xf32>
    %381 = vector.extract_strided_slice %378 {offsets = [0, 64], sizes = [8, 32], strides = [1, 1]} : vector<8x128xf32> to vector<8x32xf32>
    %382 = vector.extract_strided_slice %377 {offsets = [0, 96], sizes = [8, 32], strides = [1, 1]} : vector<8x128xf32> to vector<8x32xf32>
    %383 = arith.mulf %380, %335 : vector<8x32xf32>
    %384 = arith.mulf %379, %381 : vector<8x32xf32>
    %385 = arith.addf %383, %384 : vector<8x32xf32>
    %386 = math.tanh %385 : vector<8x32xf32>
    %387 = arith.mulf %382, %386 : vector<8x32xf32>
    %388 = tpu.concatenate %387, %356 in 1 : vector<8x32xf32>, vector<8x32xf32> -> vector<8x64xf32>
    %389 = arith.truncf %388 : vector<8x64xf32> to vector<8x64xbf16>
    %cst_100 = arith.constant dense<0.000000e+00> : vector<8x128xf32>
    %390 = tpu.matmul %389, %4, %cst_100 {dimension_numbers = #tpu.dot_dimension_numbers<[1], [0], [0], [1], [0, 0, 1, 1], [], []>} : vector<8x64xbf16>, vector<64x128xbf16>, vector<8x128xf32> -> vector<8x128xf32>
    %391 = arith.addf %390, %7 : vector<8x128xf32>
    %392 = arith.negf %391 : vector<8x128xf32>
    %393 = math.exp %392 : vector<8x128xf32>
    %cst_101 = arith.constant 1.000000e+00 : f32
    %394 = vector.broadcast %cst_101 : f32 to vector<8x128xf32>
    %395 = arith.addf %394, %393 : vector<8x128xf32>
    %396 = arith.divf %394, %395 : vector<8x128xf32>
    %397 = math.tanh %391 : vector<8x128xf32>
    %398 = vector.extract_strided_slice %396 {offsets = [0, 0], sizes = [8, 32], strides = [1, 1]} : vector<8x128xf32> to vector<8x32xf32>
    %399 = vector.extract_strided_slice %396 {offsets = [0, 32], sizes = [8, 32], strides = [1, 1]} : vector<8x128xf32> to vector<8x32xf32>
    %400 = vector.extract_strided_slice %397 {offsets = [0, 64], sizes = [8, 32], strides = [1, 1]} : vector<8x128xf32> to vector<8x32xf32>
    %401 = vector.extract_strided_slice %396 {offsets = [0, 96], sizes = [8, 32], strides = [1, 1]} : vector<8x128xf32> to vector<8x32xf32>
    %402 = arith.mulf %399, %354 : vector<8x32xf32>
    %403 = arith.mulf %398, %400 : vector<8x32xf32>
    %404 = arith.addf %402, %403 : vector<8x32xf32>
    %405 = math.tanh %404 : vector<8x32xf32>
    %406 = arith.mulf %401, %405 : vector<8x32xf32>
    %407 = arith.truncf %406 : vector<8x32xf32> to vector<8x32xbf16>
    %cst_102 = arith.constant dense<0.000000e+00> : vector<8x128xf32>
    %408 = tpu.matmul %407, %8, %cst_102 {dimension_numbers = #tpu.dot_dimension_numbers<[1], [0], [0], [1], [0, 0, 1, 1], [], []>} : vector<8x32xbf16>, vector<32x128xbf16>, vector<8x128xf32> -> vector<8x128xf32>
    %409 = arith.index_cast %c7_i32 : i32 to index
    %c0_103 = arith.constant 0 : index
    %c0_104 = arith.constant 0 : index
    %410 = vector.load %arg3[%409, %c0_103, %c0_104] : memref<8x8x128xf32, #tpu.memory_space<vmem>>, vector<1x8x128xf32>
    %411 = vector.shape_cast %410 : vector<1x8x128xf32> to vector<8x128xf32>
    %412 = arith.addf %408, %411 : vector<8x128xf32>
    %413 = arith.index_cast %c7_i32 : i32 to index
    %c0_105 = arith.constant 0 : index
    %c0_106 = arith.constant 0 : index
    %414 = vector.load %arg10[%413, %c0_105, %c0_106] : memref<8x8x128xf32, #tpu.memory_space<vmem>>, vector<1x8x128xf32>
    %415 = vector.shape_cast %414 : vector<1x8x128xf32> to vector<8x128xf32>
    %416 = vector.shape_cast %412 : vector<8x128xf32> to vector<1x8x128xf32>
    tpu.vector_store %arg10[%413, %c0_105, %c0_106], %416 {strides = array<i32>} : memref<8x8x128xf32, #tpu.memory_space<vmem>>, vector<1x8x128xf32>,
    %c8_i32 = arith.constant 8 : i32
    %c0_107 = arith.constant 0 : index
    %c0_108 = arith.constant 0 : index
    %c0_109 = arith.constant 0 : index
    %417 = vector.load %arg11[%c0_107, %c0_108, %c0_109] : memref<2x8x32xf32, #tpu.memory_space<vmem>>, vector<1x8x32xf32>
    %418 = vector.shape_cast %417 : vector<1x8x32xf32> to vector<8x32xf32>
    %419 = vector.shape_cast %387 : vector<8x32xf32> to vector<1x8x32xf32>
    tpu.vector_store %arg11[%c0_107, %c0_108, %c0_109], %419 {strides = array<i32>} : memref<2x8x32xf32, #tpu.memory_space<vmem>>, vector<1x8x32xf32>,
    %c0_110 = arith.constant 0 : index
    %c0_111 = arith.constant 0 : index
    %c0_112 = arith.constant 0 : index
    %420 = vector.load %arg12[%c0_110, %c0_111, %c0_112] : memref<2x8x32xf32, #tpu.memory_space<vmem>>, vector<1x8x32xf32>
    %421 = vector.shape_cast %420 : vector<1x8x32xf32> to vector<8x32xf32>
    %422 = vector.shape_cast %385 : vector<8x32xf32> to vector<1x8x32xf32>
    tpu.vector_store %arg12[%c0_110, %c0_111, %c0_112], %422 {strides = array<i32>} : memref<2x8x32xf32, #tpu.memory_space<vmem>>, vector<1x8x32xf32>,
    %c1_113 = arith.constant 1 : index
    %c0_114 = arith.constant 0 : index
    %c0_115 = arith.constant 0 : index
    %423 = vector.load %arg11[%c1_113, %c0_114, %c0_115] : memref<2x8x32xf32, #tpu.memory_space<vmem>>, vector<1x8x32xf32>
    %424 = vector.shape_cast %423 : vector<1x8x32xf32> to vector<8x32xf32>
    %425 = vector.shape_cast %406 : vector<8x32xf32> to vector<1x8x32xf32>
    tpu.vector_store %arg11[%c1_113, %c0_114, %c0_115], %425 {strides = array<i32>} : memref<2x8x32xf32, #tpu.memory_space<vmem>>, vector<1x8x32xf32>,
    %c1_116 = arith.constant 1 : index
    %c0_117 = arith.constant 0 : index
    %c0_118 = arith.constant 0 : index
    %426 = vector.load %arg12[%c1_116, %c0_117, %c0_118] : memref<2x8x32xf32, #tpu.memory_space<vmem>>, vector<1x8x32xf32>
    %427 = vector.shape_cast %426 : vector<1x8x32xf32> to vector<8x32xf32>
    %428 = vector.shape_cast %404 : vector<8x32xf32> to vector<1x8x32xf32>
    tpu.vector_store %arg12[%c1_116, %c0_117, %c0_118], %428 {strides = array<i32>} : memref<2x8x32xf32, #tpu.memory_space<vmem>>, vector<1x8x32xf32>,
    return
  }
  func.func @transform_0(%arg0: i32, %arg1: i32) -> (i32, i32, i32) {
    %c0_i32 = arith.constant 0 : i32
    %c0_i32_0 = arith.constant 0 : i32
    return %arg1, %arg0, %c0_i32 : i32, i32, i32
  }
  func.func @transform_1(%arg0: i32, %arg1: i32) -> (i32, i32, i32) {
    %c0_i32 = arith.constant 0 : i32
    %c0_i32_0 = arith.constant 0 : i32
    return %arg1, %arg0, %c0_i32 : i32, i32, i32
  }
  func.func @transform_2(%arg0: i32, %arg1: i32) -> (i32, i32, i32) {
    %c0_i32 = arith.constant 0 : i32
    %c0_i32_0 = arith.constant 0 : i32
    %c0_i32_1 = arith.constant 0 : i32
    return %c0_i32, %arg0, %c0_i32_0 : i32, i32, i32
  }
  func.func @transform_3(%arg0: i32, %arg1: i32) -> (i32, i32, i32) {
    %c0_i32 = arith.constant 0 : i32
    %c0_i32_0 = arith.constant 0 : i32
    %c0_i32_1 = arith.constant 0 : i32
    return %c0_i32, %arg0, %c0_i32_0 : i32, i32, i32
  }
  func.func @transform_4(%arg0: i32, %arg1: i32) -> (i32, i32) {
    %c0_i32 = arith.constant 0 : i32
    %c0_i32_0 = arith.constant 0 : i32
    %c0_i32_1 = arith.constant 0 : i32
    return %c0_i32, %c0_i32_0 : i32, i32
  }
  func.func @transform_5(%arg0: i32, %arg1: i32) -> (i32, i32) {
    %c0_i32 = arith.constant 0 : i32
    %c0_i32_0 = arith.constant 0 : i32
    %c0_i32_1 = arith.constant 0 : i32
    return %c0_i32, %c0_i32_0 : i32, i32
  }
  func.func @transform_6(%arg0: i32, %arg1: i32) -> (i32, i32) {
    %c0_i32 = arith.constant 0 : i32
    %c0_i32_0 = arith.constant 0 : i32
    %c0_i32_1 = arith.constant 0 : i32
    return %c0_i32, %c0_i32_0 : i32, i32
  }
  func.func @transform_7(%arg0: i32, %arg1: i32) -> (i32, i32) {
    %c0_i32 = arith.constant 0 : i32
    %c0_i32_0 = arith.constant 0 : i32
    %c0_i32_1 = arith.constant 0 : i32
    return %c0_i32, %c0_i32_0 : i32, i32
  }
  func.func @transform_8(%arg0: i32, %arg1: i32) -> (i32, i32, i32) {
    %c0_i32 = arith.constant 0 : i32
    %c0_i32_0 = arith.constant 0 : i32
    return %arg1, %arg0, %c0_i32 : i32, i32, i32
  }
}

</mosaic_0001>

<llo_original>
// kernel: model_forward.1
$region0: #{model_forward.1}
  #allocation0 [shape = 'u32[]', space=smem, size = 0x4, offset = 0x4, fixed_abs, tag = 'smem constant byte address 0x4 - core index']
  #allocation1 [shape = 'u32[144,128]{1,0:T(1,128)}', space=vmem, size = 0x12000, scoped, tag = 'internal scratch']
  #allocation2 [shape = 'f32[2,8,32]{2,1,0:T(8,128)}', space=vmem, size = 0x2000, scoped, tag = 'scratch operand']
  #allocation3 [shape = 'f32[2,8,32]{2,1,0:T(8,128)}', space=vmem, size = 0x2000, scoped, tag = 'scratch operand']
  %s0 = inlined_call_operand.vmem [shape: f32[8,8,128], index: 0, kind: input, shape index: {}]
  %s1 = inlined_call_operand.vmem [shape: f32[8,8,128], index: 1, kind: input, shape index: {}]
  %s2 = inlined_call_operand.vmem [shape: f32[2,8,32], index: 2, kind: input, shape index: {}]
  %s3 = inlined_call_operand.vmem [shape: f32[2,8,32], index: 3, kind: input, shape index: {}]
  %s4 = inlined_call_operand.vmem [shape: bf16[32,128], index: 4, kind: input, shape index: {}]
  %s5 = inlined_call_operand.vmem [shape: bf16[64,128], index: 5, kind: input, shape index: {}]
  %s6 = inlined_call_operand.vmem [shape: f32[1,128], index: 6, kind: input, shape index: {}]
  %s7 = inlined_call_operand.vmem [shape: bf16[32,128], index: 7, kind: input, shape index: {}]
  %s8 = inlined_call_operand.vmem [shape: f32[8,8,128], index: 8, kind: output, shape index: {}]
  %s9 = sld [smem:[#allocation0]]
  $region46: #{model_forward.1} parent=0
    _
  %s11 = ssub.s32 1, %s9
  %s12 = scalar_select 0, %s11, %s9
  // Predicated region
  $region2: #{model_forward.1} parent=0 // pred_check
    _
  $region3: #{model_forward.1} parent=0 // pred_check_branch
    %14 = sbr.rel (0) target = $region5
  $region4: #{model_forward.1} parent=0 // pred_region
    _
  $region5: #{model_forward.1} parent=0 // pred_fallthru
    _
  // Predicated region
  $region6: #{model_forward.1} parent=0 // pred_check
    _
  $region7: #{model_forward.1} parent=0 // pred_check_branch
    %16 = sbr.rel (0) target = $region9
  $region8: #{model_forward.1} parent=0 // pred_region
    _
  $region9: #{model_forward.1} parent=0 // pred_fallthru
    _
  // Predicated region
  $region10: #{model_forward.1} parent=0 // pred_check
    _
  $region11: #{model_forward.1} parent=0 // pred_check_branch
    %18 = sbr.rel (0) target = $region13
  $region12: #{model_forward.1} parent=0 // pred_region
    _
  $region13: #{model_forward.1} parent=0 // pred_fallthru
    _
  // Predicated region
  $region14: #{model_forward.1} parent=0 // pred_check
    _
  $region15: #{model_forward.1} parent=0 // pred_check_branch
    %20 = sbr.rel (0) target = $region17
  $region16: #{model_forward.1} parent=0 // pred_region
    _
  $region17: #{model_forward.1} parent=0 // pred_fallthru
    _
  // Predicated region
  $region18: #{model_forward.1} parent=0 // pred_check
    _
  $region19: #{model_forward.1} parent=0 // pred_check_branch
    %22 = sbr.rel (0) target = $region21
  $region20: #{model_forward.1} parent=0 // pred_region
    _
  $region21: #{model_forward.1} parent=0 // pred_fallthru
    _
  // Predicated region
  $region22: #{model_forward.1} parent=0 // pred_check
    _
  $region23: #{model_forward.1} parent=0 // pred_check_branch
    %24 = sbr.rel (0) target = $region25
  $region24: #{model_forward.1} parent=0 // pred_region
    _
  $region25: #{model_forward.1} parent=0 // pred_fallthru
    _
  // Predicated region
  $region26: #{model_forward.1} parent=0 // pred_check
    _
  $region27: #{model_forward.1} parent=0 // pred_check_branch
    %26 = sbr.rel (0) target = $region29
  $region28: #{model_forward.1} parent=0 // pred_region
    _
  $region29: #{model_forward.1} parent=0 // pred_fallthru
    _
  // Predicated region
  $region30: #{model_forward.1} parent=0 // pred_check
    _
  $region31: #{model_forward.1} parent=0 // pred_check_branch
    %28 = sbr.rel (0) target = $region33
  $region32: #{model_forward.1} parent=0 // pred_region
    _
  $region33: #{model_forward.1} parent=0 // pred_fallthru
    _
  %p30 = scmp.eq.s32.totalorder 0, 0
  // Predicated region
  $region34: #{model_forward.1} parent=0 // pred_check
    %p31 = pneg %p30
  $region35: #{model_forward.1} parent=0 // pred_check_branch
    %33 = sbr.rel (%p31) target = $region37
  $region36: #{model_forward.1} parent=0 // pred_region
    %v34 = vld [vmem:[%s2] sm:$0xff]
    %v35 = vld [vmem:[%s2 + $0x8] sm:$0xff]
    %vm36 = vcmask 261120
    %37 = vst.msk [vmem:[#allocation2] sm:$0xff] %vm36, %v34
    %38 = vst.msk [vmem:[#allocation2 + $0x8] sm:$0xff] %vm36, %v35
    %v39 = vld [vmem:[%s3] sm:$0xff]
    %v40 = vld [vmem:[%s3 + $0x8] sm:$0xff]
    %41 = vst.msk [vmem:[#allocation3] sm:$0xff] %vm36, %v39
    %42 = vst.msk [vmem:[#allocation3 + $0x8] sm:$0xff] %vm36, %v40
  $region37: #{model_forward.1} parent=0 // pred_fallthru
    _
  %v43 = vld [vmem:[%s4] sm:$0xf]
  %v44 = vld [vmem:[%s4 + $0x4] sm:$0xf]
  %v45 = vld [vmem:[%s4 + $0x8] sm:$0xf]
  %v46 = vld [vmem:[%s4 + $0xc] sm:$0xf]
  %v47 = vld [vmem:[%s5] sm:$0xf]
  %v48 = vld [vmem:[%s5 + $0x4] sm:$0xf]
  %v49 = vld [vmem:[%s5 + $0x8] sm:$0xf]
  %v50 = vld [vmem:[%s5 + $0xc] sm:$0xf]
  %v51 = vld [vmem:[%s5 + $0x10] sm:$0xf]
  %v52 = vld [vmem:[%s5 + $0x14] sm:$0xf]
  %v53 = vld [vmem:[%s5 + $0x18] sm:$0xf]
  %v54 = vld [vmem:[%s5 + $0x1c] sm:$0xf]
  %v55 = vld [vmem:[%s6] sm:$0x1]
  %v57 = vlaneseq
  %v58 = vshrl.u32 %v57, 7
  %v59 = vsub.s32 0, %v58
  %v60 = vrot.slane %v55, %v59
  %v62 = vld [vmem:[%s7] sm:$0xf]
  %v63 = vld [vmem:[%s7 + $0x4] sm:$0xf]
  %v64 = vld [vmem:[%s7 + $0x8] sm:$0xf]
  %v65 = vld [vmem:[%s7 + $0xc] sm:$0xf]
  %v66 = vld [vmem:[#allocation2] sm:$0xff]
  %s67 = scalar_lea.vmem [#allocation2], 8
  %v68 = vld [vmem:[%s67] sm:$0xff]
  %v69 = vld [vmem:[#allocation3] sm:$0xff]
  %s70 = scalar_lea.vmem [#allocation3], 8
  %v71 = vld [vmem:[%s70] sm:$0xff]
  %v72 = vld [vmem:[%s0] sm:$0xff]
  %v73 = vpack.c.bf16 %v66, %v66
  %v78 = vunpack.c.l.b16 %v43
  %v79 = vunpack.c.l.b16 %v44
  %v80 = vunpack.c.l.b16 %v45
  %v81 = vunpack.c.l.b16 %v46
  %v82 = vpack.c.b16 %v79, %v78
  %v83 = vpack.c.b16 %v81, %v80
  %vm86 = vcmask 261120
  %v88 = vsel %vm86, %v73, 0
  %90 = vmatprep.subr.bf16.mxu0 0
  %91 = vmatpush1.bf16.msra.mxu0 0
  %92 = vmatprep.subr.bf16.mxu0 0
  %93 = vmatpush1.bf16.msra.mxu0 0
  %94 = vmatprep.subr.bf16.mxu0 0
  %95 = vmatpush1.bf16.msra.mxu0 0
  %96 = vmatprep.subr.bf16.mxu0 0
  %97 = vmatpush1.bf16.msra.mxu0 0
  %98 = vmatprep.subr.bf16.mxu0 0
  %99 = vmatpush1.bf16.msra.mxu0 0
  %100 = vmatprep.subr.bf16.mxu0 0
  %101 = vmatpush1.bf16.msra.mxu0 0
  %102 = vmatprep.subr.bf16.mxu0 0
  %103 = vmatpush1.bf16.msra.mxu0 %v83
  %104 = vmatprep.subr.bf16.mxu0 0
  %105 = vmatpush1.bf16.msra.mxu0 %v82
  %106 = vmatprep.subr.bf16.mxu0 0
  %107 = vmatpush2.bf16.msra.mxu0 0
  %108 = vmatprep.subr.bf16.mxu0 0
  %109 = vmatpush2.bf16.msra.mxu0 0
  %110 = vmatprep.subr.bf16.mxu0 0
  %111 = vmatpush2.bf16.msra.mxu0 0
  %112 = vmatprep.subr.bf16.mxu0 0
  %113 = vmatpush2.bf16.msra.mxu0 0
  %114 = vmatprep.subr.bf16.mxu0 0
  %115 = vmatpush2.bf16.msra.mxu0 0
  %116 = vmatprep.subr.bf16.mxu0 0
  %117 = vmatpush2.bf16.msra.mxu0 0
  %118 = vmatprep.subr.bf16.mxu0 0
  %119 = vmatpush2.bf16.msra.mxu0 0
  %120 = vmatprep.subr.bf16.mxu0 0
  %121 = vmatpush2.bf16.msra.mxu0 0
  %122 = vmatprep.mubr.bf16.mxu0 0
  %123 = vmatmul.mubr.bf16.gmra.mxu0 %v88
  %v124 = vpop.f32.mrf.mxu0
  %v125 = vadd.f32 0.0, %v124
  %v126 = vpop.f32.mrf.mxu0
  %v127 = vpop.f32.mrf.mxu0
  %v128 = vpop.f32.mrf.mxu0
  %129 = vdwg.mxu0
  %v130 = vadd.f32 %v72, %v125
  %v131 = vxor.u32 %v130, 2147483648
  %v132 = vmul.f32 %v131, 1.442695
  %v133 = vpow.pop %v132
  %v134 = vadd.f32 %v133, 1.0
  %v135 = vrcp.pop %v134
  %v136 = vmul.f32 1.0, %v135
  %v137 = vtanh.pop %v130
  %139 = vrot.lane.b32.xlu0 %v69, 32
  %v140 = vpop.permute.xlu0 %139
  %v142 = vmul.f32 %v136, %v140
  %144 = vrot.lane.b32.xlu0 %v137, 64
  %v145 = vpop.permute.xlu0 %144
  %v147 = vmul.f32 %v136, %v145
  %149 = vrot.lane.b32.xlu0 %v147, 32
  %v150 = vpop.permute.xlu0 %149
  %v152 = vadd.f32 %v142, %v150
  %v153 = vtanh.pop %v152
  %155 = vrot.lane.b32.xlu0 %v153, 64
  %v156 = vpop.permute.xlu0 %155
  %v158 = vmul.f32 %v136, %v156
  %160 = vrot.lane.b32.xlu0 %v158, 32
  %v161 = vpop.permute.xlu0 %160
  %164 = vrot.lane.b32.xlu0 %v68, 32
  %v165 = vpop.permute.xlu0 %164
  %v167 = vsel %vm86, %v161, %v165
  %v168 = vpack.c.bf16 %v167, %v167
  %v177 = vunpack.c.l.b16 %v47
  %v178 = vunpack.c.l.b16 %v48
  %v179 = vunpack.c.l.b16 %v49
  %v180 = vunpack.c.l.b16 %v50
  %v181 = vunpack.c.l.b16 %v51
  %v182 = vunpack.c.l.b16 %v52
  %v183 = vunpack.c.l.b16 %v53
  %v184 = vunpack.c.l.b16 %v54
  %v185 = vpack.c.b16 %v178, %v177
  %v186 = vpack.c.b16 %v180, %v179
  %v187 = vpack.c.b16 %v182, %v181
  %v188 = vpack.c.b16 %v184, %v183
  %vm193 = vcmask 523264
  %v195 = vsel %vm193, %v168, 0
  %197 = vmatprep.subr.bf16.mxu0 0
  %198 = vmatpush1.bf16.msra.mxu0 0
  %199 = vmatprep.subr.bf16.mxu0 0
  %200 = vmatpush1.bf16.msra.mxu0 0
  %201 = vmatprep.subr.bf16.mxu0 0
  %202 = vmatpush1.bf16.msra.mxu0 0
  %203 = vmatprep.subr.bf16.mxu0 0
  %204 = vmatpush1.bf16.msra.mxu0 0
  %205 = vmatprep.subr.bf16.mxu0 0
  %206 = vmatpush1.bf16.msra.mxu0 %v188
  %207 = vmatprep.subr.bf16.mxu0 0
  %208 = vmatpush1.bf16.msra.mxu0 %v187
  %209 = vmatprep.subr.bf16.mxu0 0
  %210 = vmatpush1.bf16.msra.mxu0 %v186
  %211 = vmatprep.subr.bf16.mxu0 0
  %212 = vmatpush1.bf16.msra.mxu0 %v185
  %213 = vmatprep.subr.bf16.mxu0 0
  %214 = vmatpush2.bf16.msra.mxu0 0
  %215 = vmatprep.subr.bf16.mxu0 0
  %216 = vmatpush2.bf16.msra.mxu0 0
  %217 = vmatprep.subr.bf16.mxu0 0
  %218 = vmatpush2.bf16.msra.mxu0 0
  %219 = vmatprep.subr.bf16.mxu0 0
  %220 = vmatpush2.bf16.msra.mxu0 0
  %221 = vmatprep.subr.bf16.mxu0 0
  %222 = vmatpush2.bf16.msra.mxu0 0
  %223 = vmatprep.subr.bf16.mxu0 0
  %224 = vmatpush2.bf16.msra.mxu0 0
  %225 = vmatprep.subr.bf16.mxu0 0
  %226 = vmatpush2.bf16.msra.mxu0 0
  %227 = vmatprep.subr.bf16.mxu0 0
  %228 = vmatpush2.bf16.msra.mxu0 0
  %229 = vmatprep.mubr.bf16.mxu0 0
  %230 = vmatmul.mubr.bf16.gmra.mxu0 %v195
  %v231 = vpop.f32.mrf.mxu0
  %v232 = vadd.f32 %v60, %v231
  %v233 = vpop.f32.mrf.mxu0
  %v234 = vpop.f32.mrf.mxu0
  %v235 = vpop.f32.mrf.mxu0
  %236 = vdwg.mxu0
  %v237 = vxor.u32 %v232, 2147483648
  %v238 = vmul.f32 %v237, 1.442695
  %v239 = vpow.pop %v238
  %v240 = vadd.f32 %v239, 1.0
  %v241 = vrcp.pop %v240
  %v242 = vmul.f32 1.0, %v241
  %v243 = vtanh.pop %v232
  %245 = vrot.lane.b32.xlu0 %v71, 32
  %v246 = vpop.permute.xlu0 %245
  %v248 = vmul.f32 %v242, %v246
  %250 = vrot.lane.b32.xlu0 %v243, 64
  %v251 = vpop.permute.xlu0 %250
  %v253 = vmul.f32 %v242, %v251
  %255 = vrot.lane.b32.xlu0 %v253, 32
  %v256 = vpop.permute.xlu0 %255
  %v258 = vadd.f32 %v248, %v256
  %v259 = vtanh.pop %v258
  %261 = vrot.lane.b32.xlu0 %v259, 64
  %v262 = vpop.permute.xlu0 %261
  %v264 = vmul.f32 %v242, %v262
  %v265 = vpack.c.bf16 %v264, %v264
  %v266 = vld [vmem:[%s1] sm:$0xff]
  %268 = vrot.lane.b32.xlu0 %v265, 32
  %v269 = vpop.permute.xlu0 %268
  %v274 = vunpack.c.l.b16 %v62
  %v275 = vunpack.c.l.b16 %v63
  %v276 = vunpack.c.l.b16 %v64
  %v277 = vunpack.c.l.b16 %v65
  %v278 = vpack.c.b16 %v275, %v274
  %v279 = vpack.c.b16 %v277, %v276
  %v283 = vsel %vm86, %v269, 0
  %285 = vmatprep.subr.bf16.mxu0 0
  %286 = vmatpush1.bf16.msra.mxu0 0
  %287 = vmatprep.subr.bf16.mxu0 0
  %288 = vmatpush1.bf16.msra.mxu0 0
  %289 = vmatprep.subr.bf16.mxu0 0
  %290 = vmatpush1.bf16.msra.mxu0 0
  %291 = vmatprep.subr.bf16.mxu0 0
  %292 = vmatpush1.bf16.msra.mxu0 0
  %293 = vmatprep.subr.bf16.mxu0 0
  %294 = vmatpush1.bf16.msra.mxu0 0
  %295 = vmatprep.subr.bf16.mxu0 0
  %296 = vmatpush1.bf16.msra.mxu0 0
  %297 = vmatprep.subr.bf16.mxu0 0
  %298 = vmatpush1.bf16.msra.mxu0 %v279
  %299 = vmatprep.subr.bf16.mxu0 0
  %300 = vmatpush1.bf16.msra.mxu0 %v278
  %301 = vmatprep.subr.bf16.mxu0 0
  %302 = vmatpush2.bf16.msra.mxu0 0
  %303 = vmatprep.subr.bf16.mxu0 0
  %304 = vmatpush2.bf16.msra.mxu0 0
  %305 = vmatprep.subr.bf16.mxu0 0
  %306 = vmatpush2.bf16.msra.mxu0 0
  %307 = vmatprep.subr.bf16.mxu0 0
  %308 = vmatpush2.bf16.msra.mxu0 0
  %309 = vmatprep.subr.bf16.mxu0 0
  %310 = vmatpush2.bf16.msra.mxu0 0
  %311 = vmatprep.subr.bf16.mxu0 0
  %312 = vmatpush2.bf16.msra.mxu0 0
  %313 = vmatprep.subr.bf16.mxu0 0
  %314 = vmatpush2.bf16.msra.mxu0 0
  %315 = vmatprep.subr.bf16.mxu0 0
  %316 = vmatpush2.bf16.msra.mxu0 0
  %317 = vmatprep.mubr.bf16.mxu0 0
  %318 = vmatmul.mubr.bf16.gmra.mxu0 %v283
  %v319 = vpop.f32.mrf.mxu0
  %v320 = vadd.f32 %v266, %v319
  %v321 = vpop.f32.mrf.mxu0
  %v322 = vpop.f32.mrf.mxu0
  %v323 = vpop.f32.mrf.mxu0
  %324 = vdwg.mxu0
  %325 = vst [vmem:[%s8] sm:$0xff] %v320
  %s326 = scalar_lea.vmem %s0, 8
  %v327 = vld [vmem:[%s326] sm:$0xff]
  %v328 = vpack.c.bf16 %v158, %v158
  %330 = vrot.lane.b32.xlu0 %v328, 32
  %v331 = vpop.permute.xlu0 %330
  %v333 = vsel %vm86, %v331, 0
  %335 = vmatprep.subr.bf16.mxu0 0
  %336 = vmatpush1.bf16.msra.mxu0 0
  %337 = vmatprep.subr.bf16.mxu0 0
  %338 = vmatpush1.bf16.msra.mxu0 0
  %339 = vmatprep.subr.bf16.mxu0 0
  %340 = vmatpush1.bf16.msra.mxu0 0
  %341 = vmatprep.subr.bf16.mxu0 0
  %342 = vmatpush1.bf16.msra.mxu0 0
  %343 = vmatprep.subr.bf16.mxu0 0
  %344 = vmatpush1.bf16.msra.mxu0 0
  %345 = vmatprep.subr.bf16.mxu0 0
  %346 = vmatpush1.bf16.msra.mxu0 0
  %347 = vmatprep.subr.bf16.mxu0 0
  %348 = vmatpush1.bf16.msra.mxu0 %v83
  %349 = vmatprep.subr.bf16.mxu0 0
  %350 = vmatpush1.bf16.msra.mxu0 %v82
  %351 = vmatprep.subr.bf16.mxu0 0
  %352 = vmatpush2.bf16.msra.mxu0 0
  %353 = vmatprep.subr.bf16.mxu0 0
  %354 = vmatpush2.bf16.msra.mxu0 0
  %355 = vmatprep.subr.bf16.mxu0 0
  %356 = vmatpush2.bf16.msra.mxu0 0
  %357 = vmatprep.subr.bf16.mxu0 0
  %358 = vmatpush2.bf16.msra.mxu0 0
  %359 = vmatprep.subr.bf16.mxu0 0
  %360 = vmatpush2.bf16.msra.mxu0 0
  %361 = vmatprep.subr.bf16.mxu0 0
  %362 = vmatpush2.bf16.msra.mxu0 0
  %363 = vmatprep.subr.bf16.mxu0 0
  %364 = vmatpush2.bf16.msra.mxu0 0
  %365 = vmatprep.subr.bf16.mxu0 0
  %366 = vmatpush2.bf16.msra.mxu0 0
  %367 = vmatprep.mubr.bf16.mxu0 0
  %368 = vmatmul.mubr.bf16.gmra.mxu0 %v333
  %v369 = vpop.f32.mrf.mxu0
  %v370 = vadd.f32 0.0, %v369
  %v371 = vpop.f32.mrf.mxu0
  %v372 = vpop.f32.mrf.mxu0
  %v373 = vpop.f32.mrf.mxu0
  %374 = vdwg.mxu0
  %v375 = vadd.f32 %v327, %v370
  %v376 = vxor.u32 %v375, 2147483648
  %v377 = vmul.f32 %v376, 1.442695
  %v378 = vpow.pop %v377
  %v379 = vadd.f32 %v378, 1.0
  %v380 = vrcp.pop %v379
  %v381 = vmul.f32 1.0, %v380
  %v382 = vtanh.pop %v375
  %v383 = vmul.f32 %v381, %v152
  %385 = vrot.lane.b32.xlu0 %v382, 64
  %v386 = vpop.permute.xlu0 %385
  %v388 = vmul.f32 %v381, %v386
  %390 = vrot.lane.b32.xlu0 %v388, 32
  %v391 = vpop.permute.xlu0 %390
  %v393 = vadd.f32 %v383, %v391
  %v394 = vtanh.pop %v393
  %396 = vrot.lane.b32.xlu0 %v394, 64
  %v397 = vpop.permute.xlu0 %396
  %v399 = vmul.f32 %v381, %v397
  %401 = vrot.lane.b32.xlu0 %v399, 32
  %v402 = vpop.permute.xlu0 %401
  %405 = vrot.lane.b32.xlu0 %v264, 64
  %v406 = vpop.permute.xlu0 %405
  %v408 = vsel %vm86, %v402, %v406
  %v409 = vpack.c.bf16 %v408, %v408
  %v411 = vsel %vm193, %v409, 0
  %413 = vmatprep.subr.bf16.mxu0 0
  %414 = vmatpush1.bf16.msra.mxu0 0
  %415 = vmatprep.subr.bf16.mxu0 0
  %416 = vmatpush1.bf16.msra.mxu0 0
  %417 = vmatprep.subr.bf16.mxu0 0
  %418 = vmatpush1.bf16.msra.mxu0 0
  %419 = vmatprep.subr.bf16.mxu0 0
  %420 = vmatpush1.bf16.msra.mxu0 0
  %421 = vmatprep.subr.bf16.mxu0 0
  %422 = vmatpush1.bf16.msra.mxu0 %v188
  %423 = vmatprep.subr.bf16.mxu0 0
  %424 = vmatpush1.bf16.msra.mxu0 %v187
  %425 = vmatprep.subr.bf16.mxu0 0
  %426 = vmatpush1.bf16.msra.mxu0 %v186
  %427 = vmatprep.subr.bf16.mxu0 0
  %428 = vmatpush1.bf16.msra.mxu0 %v185
  %429 = vmatprep.subr.bf16.mxu0 0
  %430 = vmatpush2.bf16.msra.mxu0 0
  %431 = vmatprep.subr.bf16.mxu0 0
  %432 = vmatpush2.bf16.msra.mxu0 0
  %433 = vmatprep.subr.bf16.mxu0 0
  %434 = vmatpush2.bf16.msra.mxu0 0
  %435 = vmatprep.subr.bf16.mxu0 0
  %436 = vmatpush2.bf16.msra.mxu0 0
  %437 = vmatprep.subr.bf16.mxu0 0
  %438 = vmatpush2.bf16.msra.mxu0 0
  %439 = vmatprep.subr.bf16.mxu0 0
  %440 = vmatpush2.bf16.msra.mxu0 0
  %441 = vmatprep.subr.bf16.mxu0 0
  %442 = vmatpush2.bf16.msra.mxu0 0
  %443 = vmatprep.subr.bf16.mxu0 0
  %444 = vmatpush2.bf16.msra.mxu0 0
  %445 = vmatprep.mubr.bf16.mxu0 0
  %446 = vmatmul.mubr.bf16.gmra.mxu0 %v411
  %v447 = vpop.f32.mrf.mxu0
  %v448 = vadd.f32 %v60, %v447
  %v449 = vpop.f32.mrf.mxu0
  %v450 = vpop.f32.mrf.mxu0
  %v451 = vpop.f32.mrf.mxu0
  %452 = vdwg.mxu0
  %v453 = vxor.u32 %v448, 2147483648
  %v454 = vmul.f32 %v453, 1.442695
  %v455 = vpow.pop %v454
  %v456 = vadd.f32 %v455, 1.0
  %v457 = vrcp.pop %v456
  %v458 = vmul.f32 1.0, %v457
  %v459 = vtanh.pop %v448
  %v460 = vmul.f32 %v458, %v258
  %462 = vrot.lane.b32.xlu0 %v459, 64
  %v463 = vpop.permute.xlu0 %462
  %v465 = vmul.f32 %v458, %v463
  %467 = vrot.lane.b32.xlu0 %v465, 32
  %v468 = vpop.permute.xlu0 %467
  %v470 = vadd.f32 %v460, %v468
  %v471 = vtanh.pop %v470
  %473 = vrot.lane.b32.xlu0 %v471, 64
  %v474 = vpop.permute.xlu0 %473
  %v476 = vmul.f32 %v458, %v474
  %v477 = vpack.c.bf16 %v476, %v476
  %s478 = scalar_lea.vmem %s1, 8
  %v479 = vld [vmem:[%s478] sm:$0xff]
  %481 = vrot.lane.b32.xlu0 %v477, 32
  %v482 = vpop.permute.xlu0 %481
  %v484 = vsel %vm86, %v482, 0
  %486 = vmatprep.subr.bf16.mxu0 0
  %487 = vmatpush1.bf16.msra.mxu0 0
  %488 = vmatprep.subr.bf16.mxu0 0
  %489 = vmatpush1.bf16.msra.mxu0 0
  %490 = vmatprep.subr.bf16.mxu0 0
  %491 = vmatpush1.bf16.msra.mxu0 0
  %492 = vmatprep.subr.bf16.mxu0 0
  %493 = vmatpush1.bf16.msra.mxu0 0
  %494 = vmatprep.subr.bf16.mxu0 0
  %495 = vmatpush1.bf16.msra.mxu0 0
  %496 = vmatprep.subr.bf16.mxu0 0
  %497 = vmatpush1.bf16.msra.mxu0 0
  %498 = vmatprep.subr.bf16.mxu0 0
  %499 = vmatpush1.bf16.msra.mxu0 %v279
  %500 = vmatprep.subr.bf16.mxu0 0
  %501 = vmatpush1.bf16.msra.mxu0 %v278
  %502 = vmatprep.subr.bf16.mxu0 0
  %503 = vmatpush2.bf16.msra.mxu0 0
  %504 = vmatprep.subr.bf16.mxu0 0
  %505 = vmatpush2.bf16.msra.mxu0 0
  %506 = vmatprep.subr.bf16.mxu0 0
  %507 = vmatpush2.bf16.msra.mxu0 0
  %508 = vmatprep.subr.bf16.mxu0 0
  %509 = vmatpush2.bf16.msra.mxu0 0
  %510 = vmatprep.subr.bf16.mxu0 0
  %511 = vmatpush2.bf16.msra.mxu0 0
  %512 = vmatprep.subr.bf16.mxu0 0
  %513 = vmatpush2.bf16.msra.mxu0 0
  %514 = vmatprep.subr.bf16.mxu0 0
  %515 = vmatpush2.bf16.msra.mxu0 0
  %516 = vmatprep.subr.bf16.mxu0 0
  %517 = vmatpush2.bf16.msra.mxu0 0
  %518 = vmatprep.mubr.bf16.mxu0 0
  %519 = vmatmul.mubr.bf16.gmra.mxu0 %v484
  %v520 = vpop.f32.mrf.mxu0
  %v521 = vadd.f32 %v479, %v520
  %v522 = vpop.f32.mrf.mxu0
  %v523 = vpop.f32.mrf.mxu0
  %v524 = vpop.f32.mrf.mxu0
  %525 = vdwg.mxu0
  %s526 = scalar_lea.vmem %s8, 8
  %527 = vst [vmem:[%s526] sm:$0xff] %v521
  %s528 = scalar_lea.vmem %s0, 16
  %v529 = vld [vmem:[%s528] sm:$0xff]
  %v530 = vpack.c.bf16 %v399, %v399
  %532 = vrot.lane.b32.xlu0 %v530, 32
  %v533 = vpop.permute.xlu0 %532
  %v535 = vsel %vm86, %v533, 0
  %537 = vmatprep.subr.bf16.mxu0 0
  %538 = vmatpush1.bf16.msra.mxu0 0
  %539 = vmatprep.subr.bf16.mxu0 0
  %540 = vmatpush1.bf16.msra.mxu0 0
  %541 = vmatprep.subr.bf16.mxu0 0
  %542 = vmatpush1.bf16.msra.mxu0 0
  %543 = vmatprep.subr.bf16.mxu0 0
  %544 = vmatpush1.bf16.msra.mxu0 0
  %545 = vmatprep.subr.bf16.mxu0 0
  %546 = vmatpush1.bf16.msra.mxu0 0
  %547 = vmatprep.subr.bf16.mxu0 0
  %548 = vmatpush1.bf16.msra.mxu0 0
  %549 = vmatprep.subr.bf16.mxu0 0
  %550 = vmatpush1.bf16.msra.mxu0 %v83
  %551 = vmatprep.subr.bf16.mxu0 0
  %552 = vmatpush1.bf16.msra.mxu0 %v82
  %553 = vmatprep.subr.bf16.mxu0 0
  %554 = vmatpush2.bf16.msra.mxu0 0
  %555 = vmatprep.subr.bf16.mxu0 0
  %556 = vmatpush2.bf16.msra.mxu0 0
  %557 = vmatprep.subr.bf16.mxu0 0
  %558 = vmatpush2.bf16.msra.mxu0 0
  %559 = vmatprep.subr.bf16.mxu0 0
  %560 = vmatpush2.bf16.msra.mxu0 0
  %561 = vmatprep.subr.bf16.mxu0 0
  %562 = vmatpush2.bf16.msra.mxu0 0
  %563 = vmatprep.subr.bf16.mxu0 0
  %564 = vmatpush2.bf16.msra.mxu0 0
  %565 = vmatprep.subr.bf16.mxu0 0
  %566 = vmatpush2.bf16.msra.mxu0 0
  %567 = vmatprep.subr.bf16.mxu0 0
  %568 = vmatpush2.bf16.msra.mxu0 0
  %569 = vmatprep.mubr.bf16.mxu0 0
  %570 = vmatmul.mubr.bf16.gmra.mxu0 %v535
  %v571 = vpop.f32.mrf.mxu0
  %v572 = vadd.f32 0.0, %v571
  %v573 = vpop.f32.mrf.mxu0
  %v574 = vpop.f32.mrf.mxu0
  %v575 = vpop.f32.mrf.mxu0
  %576 = vdwg.mxu0
  %v577 = vadd.f32 %v529, %v572
  %v578 = vxor.u32 %v577, 2147483648
  %v579 = vmul.f32 %v578, 1.442695
  %v580 = vpow.pop %v579
  %v581 = vadd.f32 %v580, 1.0
  %v582 = vrcp.pop %v581
  %v583 = vmul.f32 1.0, %v582
  %v584 = vtanh.pop %v577
  %v585 = vmul.f32 %v583, %v393
  %587 = vrot.lane.b32.xlu0 %v584, 64
  %v588 = vpop.permute.xlu0 %587
  %v590 = vmul.f32 %v583, %v588
  %592 = vrot.lane.b32.xlu0 %v590, 32
  %v593 = vpop.permute.xlu0 %592
  %v595 = vadd.f32 %v585, %v593
  %v596 = vtanh.pop %v595
  %598 = vrot.lane.b32.xlu0 %v596, 64
  %v599 = vpop.permute.xlu0 %598
  %v601 = vmul.f32 %v583, %v599
  %603 = vrot.lane.b32.xlu0 %v601, 32
  %v604 = vpop.permute.xlu0 %603
  %607 = vrot.lane.b32.xlu0 %v476, 64
  %v608 = vpop.permute.xlu0 %607
  %v610 = vsel %vm86, %v604, %v608
  %v611 = vpack.c.bf16 %v610, %v610
  %v613 = vsel %vm193, %v611, 0
  %615 = vmatprep.subr.bf16.mxu0 0
  %616 = vmatpush1.bf16.msra.mxu0 0
  %617 = vmatprep.subr.bf16.mxu0 0
  %618 = vmatpush1.bf16.msra.mxu0 0
  %619 = vmatprep.subr.bf16.mxu0 0
  %620 = vmatpush1.bf16.msra.mxu0 0
  %621 = vmatprep.subr.bf16.mxu0 0
  %622 = vmatpush1.bf16.msra.mxu0 0
  %623 = vmatprep.subr.bf16.mxu0 0
  %624 = vmatpush1.bf16.msra.mxu0 %v188
  %625 = vmatprep.subr.bf16.mxu0 0
  %626 = vmatpush1.bf16.msra.mxu0 %v187
  %627 = vmatprep.subr.bf16.mxu0 0
  %628 = vmatpush1.bf16.msra.mxu0 %v186
  %629 = vmatprep.subr.bf16.mxu0 0
  %630 = vmatpush1.bf16.msra.mxu0 %v185
  %631 = vmatprep.subr.bf16.mxu0 0
  %632 = vmatpush2.bf16.msra.mxu0 0
  %633 = vmatprep.subr.bf16.mxu0 0
  %634 = vmatpush2.bf16.msra.mxu0 0
  %635 = vmatprep.subr.bf16.mxu0 0
  %636 = vmatpush2.bf16.msra.mxu0 0
  %637 = vmatprep.subr.bf16.mxu0 0
  %638 = vmatpush2.bf16.msra.mxu0 0
  %639 = vmatprep.subr.bf16.mxu0 0
  %640 = vmatpush2.bf16.msra.mxu0 0
  %641 = vmatprep.subr.bf16.mxu0 0
  %642 = vmatpush2.bf16.msra.mxu0 0
  %643 = vmatprep.subr.bf16.mxu0 0
  %644 = vmatpush2.bf16.msra.mxu0 0
  %645 = vmatprep.subr.bf16.mxu0 0
  %646 = vmatpush2.bf16.msra.mxu0 0
  %647 = vmatprep.mubr.bf16.mxu0 0
  %648 = vmatmul.mubr.bf16.gmra.mxu0 %v613
  %v649 = vpop.f32.mrf.mxu0
  %v650 = vadd.f32 %v60, %v649
  %v651 = vpop.f32.mrf.mxu0
  %v652 = vpop.f32.mrf.mxu0
  %v653 = vpop.f32.mrf.mxu0
  %654 = vdwg.mxu0
  %v655 = vxor.u32 %v650, 2147483648
  %v656 = vmul.f32 %v655, 1.442695
  %v657 = vpow.pop %v656
  %v658 = vadd.f32 %v657, 1.0
  %v659 = vrcp.pop %v658
  %v660 = vmul.f32 1.0, %v659
  %v661 = vtanh.pop %v650
  %v662 = vmul.f32 %v660, %v470
  %664 = vrot.lane.b32.xlu0 %v661, 64
  %v665 = vpop.permute.xlu0 %664
  %v667 = vmul.f32 %v660, %v665
  %669 = vrot.lane.b32.xlu0 %v667, 32
  %v670 = vpop.permute.xlu0 %669
  %v672 = vadd.f32 %v662, %v670
  %v673 = vtanh.pop %v672
  %675 = vrot.lane.b32.xlu0 %v673, 64
  %v676 = vpop.permute.xlu0 %675
  %v678 = vmul.f32 %v660, %v676
  %v679 = vpack.c.bf16 %v678, %v678
  %s680 = scalar_lea.vmem %s1, 16
  %v681 = vld [vmem:[%s680] sm:$0xff]
  %683 = vrot.lane.b32.xlu0 %v679, 32
  %v684 = vpop.permute.xlu0 %683
  %v686 = vsel %vm86, %v684, 0
  %688 = vmatprep.subr.bf16.mxu0 0
  %689 = vmatpush1.bf16.msra.mxu0 0
  %690 = vmatprep.subr.bf16.mxu0 0
  %691 = vmatpush1.bf16.msra.mxu0 0
  %692 = vmatprep.subr.bf16.mxu0 0
  %693 = vmatpush1.bf16.msra.mxu0 0
  %694 = vmatprep.subr.bf16.mxu0 0
  %695 = vmatpush1.bf16.msra.mxu0 0
  %696 = vmatprep.subr.bf16.mxu0 0
  %697 = vmatpush1.bf16.msra.mxu0 0
  %698 = vmatprep.subr.bf16.mxu0 0
  %699 = vmatpush1.bf16.msra.mxu0 0
  %700 = vmatprep.subr.bf16.mxu0 0
  %701 = vmatpush1.bf16.msra.mxu0 %v279
  %702 = vmatprep.subr.bf16.mxu0 0
  %703 = vmatpush1.bf16.msra.mxu0 %v278
  %704 = vmatprep.subr.bf16.mxu0 0
  %705 = vmatpush2.bf16.msra.mxu0 0
  %706 = vmatprep.subr.bf16.mxu0 0
  %707 = vmatpush2.bf16.msra.mxu0 0
  %708 = vmatprep.subr.bf16.mxu0 0
  %709 = vmatpush2.bf16.msra.mxu0 0
  %710 = vmatprep.subr.bf16.mxu0 0
  %711 = vmatpush2.bf16.msra.mxu0 0
  %712 = vmatprep.subr.bf16.mxu0 0
  %713 = vmatpush2.bf16.msra.mxu0 0
  %714 = vmatprep.subr.bf16.mxu0 0
  %715 = vmatpush2.bf16.msra.mxu0 0
  %716 = vmatprep.subr.bf16.mxu0 0
  %717 = vmatpush2.bf16.msra.mxu0 0
  %718 = vmatprep.subr.bf16.mxu0 0
  %719 = vmatpush2.bf16.msra.mxu0 0
  %720 = vmatprep.mubr.bf16.mxu0 0
  %721 = vmatmul.mubr.bf16.gmra.mxu0 %v686
  %v722 = vpop.f32.mrf.mxu0
  %v723 = vadd.f32 %v681, %v722
  %v724 = vpop.f32.mrf.mxu0
  %v725 = vpop.f32.mrf.mxu0
  %v726 = vpop.f32.mrf.mxu0
  %727 = vdwg.mxu0
  %s728 = scalar_lea.vmem %s8, 16
  %729 = vst [vmem:[%s728] sm:$0xff] %v723
  %s730 = scalar_lea.vmem %s0, 24
  %v731 = vld [vmem:[%s730] sm:$0xff]
  %v732 = vpack.c.bf16 %v601, %v601
  %734 = vrot.lane.b32.xlu0 %v732, 32
  %v735 = vpop.permute.xlu0 %734
  %v737 = vsel %vm86, %v735, 0
  %739 = vmatprep.subr.bf16.mxu0 0
  %740 = vmatpush1.bf16.msra.mxu0 0
  %741 = vmatprep.subr.bf16.mxu0 0
  %742 = vmatpush1.bf16.msra.mxu0 0
  %743 = vmatprep.subr.bf16.mxu0 0
  %744 = vmatpush1.bf16.msra.mxu0 0
  %745 = vmatprep.subr.bf16.mxu0 0
  %746 = vmatpush1.bf16.msra.mxu0 0
  %747 = vmatprep.subr.bf16.mxu0 0
  %748 = vmatpush1.bf16.msra.mxu0 0
  %749 = vmatprep.subr.bf16.mxu0 0
  %750 = vmatpush1.bf16.msra.mxu0 0
  %751 = vmatprep.subr.bf16.mxu0 0
  %752 = vmatpush1.bf16.msra.mxu0 %v83
  %753 = vmatprep.subr.bf16.mxu0 0
  %754 = vmatpush1.bf16.msra.mxu0 %v82
  %755 = vmatprep.subr.bf16.mxu0 0
  %756 = vmatpush2.bf16.msra.mxu0 0
  %757 = vmatprep.subr.bf16.mxu0 0
  %758 = vmatpush2.bf16.msra.mxu0 0
  %759 = vmatprep.subr.bf16.mxu0 0
  %760 = vmatpush2.bf16.msra.mxu0 0
  %761 = vmatprep.subr.bf16.mxu0 0
  %762 = vmatpush2.bf16.msra.mxu0 0
  %763 = vmatprep.subr.bf16.mxu0 0
  %764 = vmatpush2.bf16.msra.mxu0 0
  %765 = vmatprep.subr.bf16.mxu0 0
  %766 = vmatpush2.bf16.msra.mxu0 0
  %767 = vmatprep.subr.bf16.mxu0 0
  %768 = vmatpush2.bf16.msra.mxu0 0
  %769 = vmatprep.subr.bf16.mxu0 0
  %770 = vmatpush2.bf16.msra.mxu0 0
  %771 = vmatprep.mubr.bf16.mxu0 0
  %772 = vmatmul.mubr.bf16.gmra.mxu0 %v737
  %v773 = vpop.f32.mrf.mxu0
  %v774 = vadd.f32 0.0, %v773
  %v775 = vpop.f32.mrf.mxu0
  %v776 = vpop.f32.mrf.mxu0
  %v777 = vpop.f32.mrf.mxu0
  %778 = vdwg.mxu0
  %v779 = vadd.f32 %v731, %v774
  %v780 = vxor.u32 %v779, 2147483648
  %v781 = vmul.f32 %v780, 1.442695
  %v782 = vpow.pop %v781
  %v783 = vadd.f32 %v782, 1.0
  %v784 = vrcp.pop %v783
  %v785 = vmul.f32 1.0, %v784
  %v786 = vtanh.pop %v779
  %v787 = vmul.f32 %v785, %v595
  %789 = vrot.lane.b32.xlu0 %v786, 64
  %v790 = vpop.permute.xlu0 %789
  %v792 = vmul.f32 %v785, %v790
  %794 = vrot.lane.b32.xlu0 %v792, 32
  %v795 = vpop.permute.xlu0 %794
  %v797 = vadd.f32 %v787, %v795
  %v798 = vtanh.pop %v797
  %800 = vrot.lane.b32.xlu0 %v798, 64
  %v801 = vpop.permute.xlu0 %800
  %v803 = vmul.f32 %v785, %v801
  %805 = vrot.lane.b32.xlu0 %v803, 32
  %v806 = vpop.permute.xlu0 %805
  %809 = vrot.lane.b32.xlu0 %v678, 64
  %v810 = vpop.permute.xlu0 %809
  %v812 = vsel %vm86, %v806, %v810
  %v813 = vpack.c.bf16 %v812, %v812
  %v815 = vsel %vm193, %v813, 0
  %817 = vmatprep.subr.bf16.mxu0 0
  %818 = vmatpush1.bf16.msra.mxu0 0
  %819 = vmatprep.subr.bf16.mxu0 0
  %820 = vmatpush1.bf16.msra.mxu0 0
  %821 = vmatprep.subr.bf16.mxu0 0
  %822 = vmatpush1.bf16.msra.mxu0 0
  %823 = vmatprep.subr.bf16.mxu0 0
  %824 = vmatpush1.bf16.msra.mxu0 0
  %825 = vmatprep.subr.bf16.mxu0 0
  %826 = vmatpush1.bf16.msra.mxu0 %v188
  %827 = vmatprep.subr.bf16.mxu0 0
  %828 = vmatpush1.bf16.msra.mxu0 %v187
  %829 = vmatprep.subr.bf16.mxu0 0
  %830 = vmatpush1.bf16.msra.mxu0 %v186
  %831 = vmatprep.subr.bf16.mxu0 0
  %832 = vmatpush1.bf16.msra.mxu0 %v185
  %833 = vmatprep.subr.bf16.mxu0 0
  %834 = vmatpush2.bf16.msra.mxu0 0
  %835 = vmatprep.subr.bf16.mxu0 0
  %836 = vmatpush2.bf16.msra.mxu0 0
  %837 = vmatprep.subr.bf16.mxu0 0
  %838 = vmatpush2.bf16.msra.mxu0 0
  %839 = vmatprep.subr.bf16.mxu0 0
  %840 = vmatpush2.bf16.msra.mxu0 0
  %841 = vmatprep.subr.bf16.mxu0 0
  %842 = vmatpush2.bf16.msra.mxu0 0
  %843 = vmatprep.subr.bf16.mxu0 0
  %844 = vmatpush2.bf16.msra.mxu0 0
  %845 = vmatprep.subr.bf16.mxu0 0
  %846 = vmatpush2.bf16.msra.mxu0 0
  %847 = vmatprep.subr.bf16.mxu0 0
  %848 = vmatpush2.bf16.msra.mxu0 0
  %849 = vmatprep.mubr.bf16.mxu0 0
  %850 = vmatmul.mubr.bf16.gmra.mxu0 %v815
  %v851 = vpop.f32.mrf.mxu0
  %v852 = vadd.f32 %v60, %v851
  %v853 = vpop.f32.mrf.mxu0
  %v854 = vpop.f32.mrf.mxu0
  %v855 = vpop.f32.mrf.mxu0
  %856 = vdwg.mxu0
  %v857 = vxor.u32 %v852, 2147483648
  %v858 = vmul.f32 %v857, 1.442695
  %v859 = vpow.pop %v858
  %v860 = vadd.f32 %v859, 1.0
  %v861 = vrcp.pop %v860
  %v862 = vmul.f32 1.0, %v861
  %v863 = vtanh.pop %v852
  %v864 = vmul.f32 %v862, %v672
  %866 = vrot.lane.b32.xlu0 %v863, 64
  %v867 = vpop.permute.xlu0 %866
  %v869 = vmul.f32 %v862, %v867
  %871 = vrot.lane.b32.xlu0 %v869, 32
  %v872 = vpop.permute.xlu0 %871
  %v874 = vadd.f32 %v864, %v872
  %v875 = vtanh.pop %v874
  %877 = vrot.lane.b32.xlu0 %v875, 64
  %v878 = vpop.permute.xlu0 %877
  %v880 = vmul.f32 %v862, %v878
  %v881 = vpack.c.bf16 %v880, %v880
  %s882 = scalar_lea.vmem %s1, 24
  %v883 = vld [vmem:[%s882] sm:$0xff]
  %885 = vrot.lane.b32.xlu0 %v881, 32
  %v886 = vpop.permute.xlu0 %885
  %v888 = vsel %vm86, %v886, 0
  %890 = vmatprep.subr.bf16.mxu0 0
  %891 = vmatpush1.bf16.msra.mxu0 0
  %892 = vmatprep.subr.bf16.mxu0 0
  %893 = vmatpush1.bf16.msra.mxu0 0
  %894 = vmatprep.subr.bf16.mxu0 0
  %895 = vmatpush1.bf16.msra.mxu0 0
  %896 = vmatprep.subr.bf16.mxu0 0
  %897 = vmatpush1.bf16.msra.mxu0 0
  %898 = vmatprep.subr.bf16.mxu0 0
  %899 = vmatpush1.bf16.msra.mxu0 0
  %900 = vmatprep.subr.bf16.mxu0 0
  %901 = vmatpush1.bf16.msra.mxu0 0
  %902 = vmatprep.subr.bf16.mxu0 0
  %903 = vmatpush1.bf16.msra.mxu0 %v279
  %904 = vmatprep.subr.bf16.mxu0 0
  %905 = vmatpush1.bf16.msra.mxu0 %v278
  %906 = vmatprep.subr.bf16.mxu0 0
  %907 = vmatpush2.bf16.msra.mxu0 0
  %908 = vmatprep.subr.bf16.mxu0 0
  %909 = vmatpush2.bf16.msra.mxu0 0
  %910 = vmatprep.subr.bf16.mxu0 0
  %911 = vmatpush2.bf16.msra.mxu0 0
  %912 = vmatprep.subr.bf16.mxu0 0
  %913 = vmatpush2.bf16.msra.mxu0 0
  %914 = vmatprep.subr.bf16.mxu0 0
  %915 = vmatpush2.bf16.msra.mxu0 0
  %916 = vmatprep.subr.bf16.mxu0 0
  %917 = vmatpush2.bf16.msra.mxu0 0
  %918 = vmatprep.subr.bf16.mxu0 0
  %919 = vmatpush2.bf16.msra.mxu0 0
  %920 = vmatprep.subr.bf16.mxu0 0
  %921 = vmatpush2.bf16.msra.mxu0 0
  %922 = vmatprep.mubr.bf16.mxu0 0
  %923 = vmatmul.mubr.bf16.gmra.mxu0 %v888
  %v924 = vpop.f32.mrf.mxu0
  %v925 = vadd.f32 %v883, %v924
  %v926 = vpop.f32.mrf.mxu0
  %v927 = vpop.f32.mrf.mxu0
  %v928 = vpop.f32.mrf.mxu0
  %929 = vdwg.mxu0
  %s930 = scalar_lea.vmem %s8, 24
  %931 = vst [vmem:[%s930] sm:$0xff] %v925
  %s932 = scalar_lea.vmem %s0, 32
  %v933 = vld [vmem:[%s932] sm:$0xff]
  %v934 = vpack.c.bf16 %v803, %v803
  %936 = vrot.lane.b32.xlu0 %v934, 32
  %v937 = vpop.permute.xlu0 %936
  %v939 = vsel %vm86, %v937, 0
  %941 = vmatprep.subr.bf16.mxu0 0
  %942 = vmatpush1.bf16.msra.mxu0 0
  %943 = vmatprep.subr.bf16.mxu0 0
  %944 = vmatpush1.bf16.msra.mxu0 0
  %945 = vmatprep.subr.bf16.mxu0 0
  %946 = vmatpush1.bf16.msra.mxu0 0
  %947 = vmatprep.subr.bf16.mxu0 0
  %948 = vmatpush1.bf16.msra.mxu0 0
  %949 = vmatprep.subr.bf16.mxu0 0
  %950 = vmatpush1.bf16.msra.mxu0 0
  %951 = vmatprep.subr.bf16.mxu0 0
  %952 = vmatpush1.bf16.msra.mxu0 0
  %953 = vmatprep.subr.bf16.mxu0 0
  %954 = vmatpush1.bf16.msra.mxu0 %v83
  %955 = vmatprep.subr.bf16.mxu0 0
  %956 = vmatpush1.bf16.msra.mxu0 %v82
  %957 = vmatprep.subr.bf16.mxu0 0
  %958 = vmatpush2.bf16.msra.mxu0 0
  %959 = vmatprep.subr.bf16.mxu0 0
  %960 = vmatpush2.bf16.msra.mxu0 0
  %961 = vmatprep.subr.bf16.mxu0 0
  %962 = vmatpush2.bf16.msra.mxu0 0
  %963 = vmatprep.subr.bf16.mxu0 0
  %964 = vmatpush2.bf16.msra.mxu0 0
  %965 = vmatprep.subr.bf16.mxu0 0
  %966 = vmatpush2.bf16.msra.mxu0 0
  %967 = vmatprep.subr.bf16.mxu0 0
  %968 = vmatpush2.bf16.msra.mxu0 0
  %969 = vmatprep.subr.bf16.mxu0 0
  %970 = vmatpush2.bf16.msra.mxu0 0
  %971 = vmatprep.subr.bf16.mxu0 0
  %972 = vmatpush2.bf16.msra.mxu0 0
  %973 = vmatprep.mubr.bf16.mxu0 0
  %974 = vmatmul.mubr.bf16.gmra.mxu0 %v939
  %v975 = vpop.f32.mrf.mxu0
  %v976 = vadd.f32 0.0, %v975
  %v977 = vpop.f32.mrf.mxu0
  %v978 = vpop.f32.mrf.mxu0
  %v979 = vpop.f32.mrf.mxu0
  %980 = vdwg.mxu0
  %v981 = vadd.f32 %v933, %v976
  %v982 = vxor.u32 %v981, 2147483648
  %v983 = vmul.f32 %v982, 1.442695
  %v984 = vpow.pop %v983
  %v985 = vadd.f32 %v984, 1.0
  %v986 = vrcp.pop %v985
  %v987 = vmul.f32 1.0, %v986
  %v988 = vtanh.pop %v981
  %v989 = vmul.f32 %v987, %v797
  %991 = vrot.lane.b32.xlu0 %v988, 64
  %v992 = vpop.permute.xlu0 %991
  %v994 = vmul.f32 %v987, %v992
  %996 = vrot.lane.b32.xlu0 %v994, 32
  %v997 = vpop.permute.xlu0 %996
  %v999 = vadd.f32 %v989, %v997
  %v1000 = vtanh.pop %v999
  %1002 = vrot.lane.b32.xlu0 %v1000, 64
  %v1003 = vpop.permute.xlu0 %1002
  %v1005 = vmul.f32 %v987, %v1003
  %1007 = vrot.lane.b32.xlu0 %v1005, 32
  %v1008 = vpop.permute.xlu0 %1007
  %1011 = vrot.lane.b32.xlu0 %v880, 64
  %v1012 = vpop.permute.xlu0 %1011
  %v1014 = vsel %vm86, %v1008, %v1012
  %v1015 = vpack.c.bf16 %v1014, %v1014
  %v1017 = vsel %vm193, %v1015, 0
  %1019 = vmatprep.subr.bf16.mxu0 0
  %1020 = vmatpush1.bf16.msra.mxu0 0
  %1021 = vmatprep.subr.bf16.mxu0 0
  %1022 = vmatpush1.bf16.msra.mxu0 0
  %1023 = vmatprep.subr.bf16.mxu0 0
  %1024 = vmatpush1.bf16.msra.mxu0 0
  %1025 = vmatprep.subr.bf16.mxu0 0
  %1026 = vmatpush1.bf16.msra.mxu0 0
  %1027 = vmatprep.subr.bf16.mxu0 0
  %1028 = vmatpush1.bf16.msra.mxu0 %v188
  %1029 = vmatprep.subr.bf16.mxu0 0
  %1030 = vmatpush1.bf16.msra.mxu0 %v187
  %1031 = vmatprep.subr.bf16.mxu0 0
  %1032 = vmatpush1.bf16.msra.mxu0 %v186
  %1033 = vmatprep.subr.bf16.mxu0 0
  %1034 = vmatpush1.bf16.msra.mxu0 %v185
  %1035 = vmatprep.subr.bf16.mxu0 0
  %1036 = vmatpush2.bf16.msra.mxu0 0
  %1037 = vmatprep.subr.bf16.mxu0 0
  %1038 = vmatpush2.bf16.msra.mxu0 0
  %1039 = vmatprep.subr.bf16.mxu0 0
  %1040 = vmatpush2.bf16.msra.mxu0 0
  %1041 = vmatprep.subr.bf16.mxu0 0
  %1042 = vmatpush2.bf16.msra.mxu0 0
  %1043 = vmatprep.subr.bf16.mxu0 0
  %1044 = vmatpush2.bf16.msra.mxu0 0
  %1045 = vmatprep.subr.bf16.mxu0 0
  %1046 = vmatpush2.bf16.msra.mxu0 0
  %1047 = vmatprep.subr.bf16.mxu0 0
  %1048 = vmatpush2.bf16.msra.mxu0 0
  %1049 = vmatprep.subr.bf16.mxu0 0
  %1050 = vmatpush2.bf16.msra.mxu0 0
  %1051 = vmatprep.mubr.bf16.mxu0 0
  %1052 = vmatmul.mubr.bf16.gmra.mxu0 %v1017
  %v1053 = vpop.f32.mrf.mxu0
  %v1054 = vadd.f32 %v60, %v1053
  %v1055 = vpop.f32.mrf.mxu0
  %v1056 = vpop.f32.mrf.mxu0
  %v1057 = vpop.f32.mrf.mxu0
  %1058 = vdwg.mxu0
  %v1059 = vxor.u32 %v1054, 2147483648
  %v1060 = vmul.f32 %v1059, 1.442695
  %v1061 = vpow.pop %v1060
  %v1062 = vadd.f32 %v1061, 1.0
  %v1063 = vrcp.pop %v1062
  %v1064 = vmul.f32 1.0, %v1063
  %v1065 = vtanh.pop %v1054
  %v1066 = vmul.f32 %v1064, %v874
  %1068 = vrot.lane.b32.xlu0 %v1065, 64
  %v1069 = vpop.permute.xlu0 %1068
  %v1071 = vmul.f32 %v1064, %v1069
  %1073 = vrot.lane.b32.xlu0 %v1071, 32
  %v1074 = vpop.permute.xlu0 %1073
  %v1076 = vadd.f32 %v1066, %v1074
  %v1077 = vtanh.pop %v1076
  %1079 = vrot.lane.b32.xlu0 %v1077, 64
  %v1080 = vpop.permute.xlu0 %1079
  %v1082 = vmul.f32 %v1064, %v1080
  %v1083 = vpack.c.bf16 %v1082, %v1082
  %s1084 = scalar_lea.vmem %s1, 32
  %v1085 = vld [vmem:[%s1084] sm:$0xff]
  %1087 = vrot.lane.b32.xlu0 %v1083, 32
  %v1088 = vpop.permute.xlu0 %1087
  %v1090 = vsel %vm86, %v1088, 0
  %1092 = vmatprep.subr.bf16.mxu0 0
  %1093 = vmatpush1.bf16.msra.mxu0 0
  %1094 = vmatprep.subr.bf16.mxu0 0
  %1095 = vmatpush1.bf16.msra.mxu0 0
  %1096 = vmatprep.subr.bf16.mxu0 0
  %1097 = vmatpush1.bf16.msra.mxu0 0
  %1098 = vmatprep.subr.bf16.mxu0 0
  %1099 = vmatpush1.bf16.msra.mxu0 0
  %1100 = vmatprep.subr.bf16.mxu0 0
  %1101 = vmatpush1.bf16.msra.mxu0 0
  %1102 = vmatprep.subr.bf16.mxu0 0
  %1103 = vmatpush1.bf16.msra.mxu0 0
  %1104 = vmatprep.subr.bf16.mxu0 0
  %1105 = vmatpush1.bf16.msra.mxu0 %v279
  %1106 = vmatprep.subr.bf16.mxu0 0
  %1107 = vmatpush1.bf16.msra.mxu0 %v278
  %1108 = vmatprep.subr.bf16.mxu0 0
  %1109 = vmatpush2.bf16.msra.mxu0 0
  %1110 = vmatprep.subr.bf16.mxu0 0
  %1111 = vmatpush2.bf16.msra.mxu0 0
  %1112 = vmatprep.subr.bf16.mxu0 0
  %1113 = vmatpush2.bf16.msra.mxu0 0
  %1114 = vmatprep.subr.bf16.mxu0 0
  %1115 = vmatpush2.bf16.msra.mxu0 0
  %1116 = vmatprep.subr.bf16.mxu0 0
  %1117 = vmatpush2.bf16.msra.mxu0 0
  %1118 = vmatprep.subr.bf16.mxu0 0
  %1119 = vmatpush2.bf16.msra.mxu0 0
  %1120 = vmatprep.subr.bf16.mxu0 0
  %1121 = vmatpush2.bf16.msra.mxu0 0
  %1122 = vmatprep.subr.bf16.mxu0 0
  %1123 = vmatpush2.bf16.msra.mxu0 0
  %1124 = vmatprep.mubr.bf16.mxu0 0
  %1125 = vmatmul.mubr.bf16.gmra.mxu0 %v1090
  %v1126 = vpop.f32.mrf.mxu0
  %v1127 = vadd.f32 %v1085, %v1126
  %v1128 = vpop.f32.mrf.mxu0
  %v1129 = vpop.f32.mrf.mxu0
  %v1130 = vpop.f32.mrf.mxu0
  %1131 = vdwg.mxu0
  %s1132 = scalar_lea.vmem %s8, 32
  %1133 = vst [vmem:[%s1132] sm:$0xff] %v1127
  %s1134 = scalar_lea.vmem %s0, 40
  %v1135 = vld [vmem:[%s1134] sm:$0xff]
  %v1136 = vpack.c.bf16 %v1005, %v1005
  %1138 = vrot.lane.b32.xlu0 %v1136, 32
  %v1139 = vpop.permute.xlu0 %1138
  %v1141 = vsel %vm86, %v1139, 0
  %1143 = vmatprep.subr.bf16.mxu0 0
  %1144 = vmatpush1.bf16.msra.mxu0 0
  %1145 = vmatprep.subr.bf16.mxu0 0
  %1146 = vmatpush1.bf16.msra.mxu0 0
  %1147 = vmatprep.subr.bf16.mxu0 0
  %1148 = vmatpush1.bf16.msra.mxu0 0
  %1149 = vmatprep.subr.bf16.mxu0 0
  %1150 = vmatpush1.bf16.msra.mxu0 0
  %1151 = vmatprep.subr.bf16.mxu0 0
  %1152 = vmatpush1.bf16.msra.mxu0 0
  %1153 = vmatprep.subr.bf16.mxu0 0
  %1154 = vmatpush1.bf16.msra.mxu0 0
  %1155 = vmatprep.subr.bf16.mxu0 0
  %1156 = vmatpush1.bf16.msra.mxu0 %v83
  %1157 = vmatprep.subr.bf16.mxu0 0
  %1158 = vmatpush1.bf16.msra.mxu0 %v82
  %1159 = vmatprep.subr.bf16.mxu0 0
  %1160 = vmatpush2.bf16.msra.mxu0 0
  %1161 = vmatprep.subr.bf16.mxu0 0
  %1162 = vmatpush2.bf16.msra.mxu0 0
  %1163 = vmatprep.subr.bf16.mxu0 0
  %1164 = vmatpush2.bf16.msra.mxu0 0
  %1165 = vmatprep.subr.bf16.mxu0 0
  %1166 = vmatpush2.bf16.msra.mxu0 0
  %1167 = vmatprep.subr.bf16.mxu0 0
  %1168 = vmatpush2.bf16.msra.mxu0 0
  %1169 = vmatprep.subr.bf16.mxu0 0
  %1170 = vmatpush2.bf16.msra.mxu0 0
  %1171 = vmatprep.subr.bf16.mxu0 0
  %1172 = vmatpush2.bf16.msra.mxu0 0
  %1173 = vmatprep.subr.bf16.mxu0 0
  %1174 = vmatpush2.bf16.msra.mxu0 0
  %1175 = vmatprep.mubr.bf16.mxu0 0
  %1176 = vmatmul.mubr.bf16.gmra.mxu0 %v1141
  %v1177 = vpop.f32.mrf.mxu0
  %v1178 = vadd.f32 0.0, %v1177
  %v1179 = vpop.f32.mrf.mxu0
  %v1180 = vpop.f32.mrf.mxu0
  %v1181 = vpop.f32.mrf.mxu0
  %1182 = vdwg.mxu0
  %v1183 = vadd.f32 %v1135, %v1178
  %v1184 = vxor.u32 %v1183, 2147483648
  %v1185 = vmul.f32 %v1184, 1.442695
  %v1186 = vpow.pop %v1185
  %v1187 = vadd.f32 %v1186, 1.0
  %v1188 = vrcp.pop %v1187
  %v1189 = vmul.f32 1.0, %v1188
  %v1190 = vtanh.pop %v1183
  %v1191 = vmul.f32 %v1189, %v999
  %1193 = vrot.lane.b32.xlu0 %v1190, 64
  %v1194 = vpop.permute.xlu0 %1193
  %v1196 = vmul.f32 %v1189, %v1194
  %1198 = vrot.lane.b32.xlu0 %v1196, 32
  %v1199 = vpop.permute.xlu0 %1198
  %v1201 = vadd.f32 %v1191, %v1199
  %v1202 = vtanh.pop %v1201
  %1204 = vrot.lane.b32.xlu0 %v1202, 64
  %v1205 = vpop.permute.xlu0 %1204
  %v1207 = vmul.f32 %v1189, %v1205
  %1209 = vrot.lane.b32.xlu0 %v1207, 32
  %v1210 = vpop.permute.xlu0 %1209
  %1213 = vrot.lane.b32.xlu0 %v1082, 64
  %v1214 = vpop.permute.xlu0 %1213
  %v1216 = vsel %vm86, %v1210, %v1214
  %v1217 = vpack.c.bf16 %v1216, %v1216
  %v1219 = vsel %vm193, %v1217, 0
  %1221 = vmatprep.subr.bf16.mxu0 0
  %1222 = vmatpush1.bf16.msra.mxu0 0
  %1223 = vmatprep.subr.bf16.mxu0 0
  %1224 = vmatpush1.bf16.msra.mxu0 0
  %1225 = vmatprep.subr.bf16.mxu0 0
  %1226 = vmatpush1.bf16.msra.mxu0 0
  %1227 = vmatprep.subr.bf16.mxu0 0
  %1228 = vmatpush1.bf16.msra.mxu0 0
  %1229 = vmatprep.subr.bf16.mxu0 0
  %1230 = vmatpush1.bf16.msra.mxu0 %v188
  %1231 = vmatprep.subr.bf16.mxu0 0
  %1232 = vmatpush1.bf16.msra.mxu0 %v187
  %1233 = vmatprep.subr.bf16.mxu0 0
  %1234 = vmatpush1.bf16.msra.mxu0 %v186
  %1235 = vmatprep.subr.bf16.mxu0 0
  %1236 = vmatpush1.bf16.msra.mxu0 %v185
  %1237 = vmatprep.subr.bf16.mxu0 0
  %1238 = vmatpush2.bf16.msra.mxu0 0
  %1239 = vmatprep.subr.bf16.mxu0 0
  %1240 = vmatpush2.bf16.msra.mxu0 0
  %1241 = vmatprep.subr.bf16.mxu0 0
  %1242 = vmatpush2.bf16.msra.mxu0 0
  %1243 = vmatprep.subr.bf16.mxu0 0
  %1244 = vmatpush2.bf16.msra.mxu0 0
  %1245 = vmatprep.subr.bf16.mxu0 0
  %1246 = vmatpush2.bf16.msra.mxu0 0
  %1247 = vmatprep.subr.bf16.mxu0 0
  %1248 = vmatpush2.bf16.msra.mxu0 0
  %1249 = vmatprep.subr.bf16.mxu0 0
  %1250 = vmatpush2.bf16.msra.mxu0 0
  %1251 = vmatprep.subr.bf16.mxu0 0
  %1252 = vmatpush2.bf16.msra.mxu0 0
  %1253 = vmatprep.mubr.bf16.mxu0 0
  %1254 = vmatmul.mubr.bf16.gmra.mxu0 %v1219
  %v1255 = vpop.f32.mrf.mxu0
  %v1256 = vadd.f32 %v60, %v1255
  %v1257 = vpop.f32.mrf.mxu0
  %v1258 = vpop.f32.mrf.mxu0
  %v1259 = vpop.f32.mrf.mxu0
  %1260 = vdwg.mxu0
  %v1261 = vxor.u32 %v1256, 2147483648
  %v1262 = vmul.f32 %v1261, 1.442695
  %v1263 = vpow.pop %v1262
  %v1264 = vadd.f32 %v1263, 1.0
  %v1265 = vrcp.pop %v1264
  %v1266 = vmul.f32 1.0, %v1265
  %v1267 = vtanh.pop %v1256
  %v1268 = vmul.f32 %v1266, %v1076
  %1270 = vrot.lane.b32.xlu0 %v1267, 64
  %v1271 = vpop.permute.xlu0 %1270
  %v1273 = vmul.f32 %v1266, %v1271
  %1275 = vrot.lane.b32.xlu0 %v1273, 32
  %v1276 = vpop.permute.xlu0 %1275
  %v1278 = vadd.f32 %v1268, %v1276
  %v1279 = vtanh.pop %v1278
  %1281 = vrot.lane.b32.xlu0 %v1279, 64
  %v1282 = vpop.permute.xlu0 %1281
  %v1284 = vmul.f32 %v1266, %v1282
  %v1285 = vpack.c.bf16 %v1284, %v1284
  %s1286 = scalar_lea.vmem %s1, 40
  %v1287 = vld [vmem:[%s1286] sm:$0xff]
  %1289 = vrot.lane.b32.xlu0 %v1285, 32
  %v1290 = vpop.permute.xlu0 %1289
  %v1292 = vsel %vm86, %v1290, 0
  %1294 = vmatprep.subr.bf16.mxu0 0
  %1295 = vmatpush1.bf16.msra.mxu0 0
  %1296 = vmatprep.subr.bf16.mxu0 0
  %1297 = vmatpush1.bf16.msra.mxu0 0
  %1298 = vmatprep.subr.bf16.mxu0 0
  %1299 = vmatpush1.bf16.msra.mxu0 0
  %1300 = vmatprep.subr.bf16.mxu0 0
  %1301 = vmatpush1.bf16.msra.mxu0 0
  %1302 = vmatprep.subr.bf16.mxu0 0
  %1303 = vmatpush1.bf16.msra.mxu0 0
  %1304 = vmatprep.subr.bf16.mxu0 0
  %1305 = vmatpush1.bf16.msra.mxu0 0
  %1306 = vmatprep.subr.bf16.mxu0 0
  %1307 = vmatpush1.bf16.msra.mxu0 %v279
  %1308 = vmatprep.subr.bf16.mxu0 0
  %1309 = vmatpush1.bf16.msra.mxu0 %v278
  %1310 = vmatprep.subr.bf16.mxu0 0
  %1311 = vmatpush2.bf16.msra.mxu0 0
  %1312 = vmatprep.subr.bf16.mxu0 0
  %1313 = vmatpush2.bf16.msra.mxu0 0
  %1314 = vmatprep.subr.bf16.mxu0 0
  %1315 = vmatpush2.bf16.msra.mxu0 0
  %1316 = vmatprep.subr.bf16.mxu0 0
  %1317 = vmatpush2.bf16.msra.mxu0 0
  %1318 = vmatprep.subr.bf16.mxu0 0
  %1319 = vmatpush2.bf16.msra.mxu0 0
  %1320 = vmatprep.subr.bf16.mxu0 0
  %1321 = vmatpush2.bf16.msra.mxu0 0
  %1322 = vmatprep.subr.bf16.mxu0 0
  %1323 = vmatpush2.bf16.msra.mxu0 0
  %1324 = vmatprep.subr.bf16.mxu0 0
  %1325 = vmatpush2.bf16.msra.mxu0 0
  %1326 = vmatprep.mubr.bf16.mxu0 0
  %1327 = vmatmul.mubr.bf16.gmra.mxu0 %v1292
  %v1328 = vpop.f32.mrf.mxu0
  %v1329 = vadd.f32 %v1287, %v1328
  %v1330 = vpop.f32.mrf.mxu0
  %v1331 = vpop.f32.mrf.mxu0
  %v1332 = vpop.f32.mrf.mxu0
  %1333 = vdwg.mxu0
  %s1334 = scalar_lea.vmem %s8, 40
  %1335 = vst [vmem:[%s1334] sm:$0xff] %v1329
  %s1336 = scalar_lea.vmem %s0, 48
  %v1337 = vld [vmem:[%s1336] sm:$0xff]
  %v1338 = vpack.c.bf16 %v1207, %v1207
  %1340 = vrot.lane.b32.xlu0 %v1338, 32
  %v1341 = vpop.permute.xlu0 %1340
  %v1343 = vsel %vm86, %v1341, 0
  %1345 = vmatprep.subr.bf16.mxu0 0
  %1346 = vmatpush1.bf16.msra.mxu0 0
  %1347 = vmatprep.subr.bf16.mxu0 0
  %1348 = vmatpush1.bf16.msra.mxu0 0
  %1349 = vmatprep.subr.bf16.mxu0 0
  %1350 = vmatpush1.bf16.msra.mxu0 0
  %1351 = vmatprep.subr.bf16.mxu0 0
  %1352 = vmatpush1.bf16.msra.mxu0 0
  %1353 = vmatprep.subr.bf16.mxu0 0
  %1354 = vmatpush1.bf16.msra.mxu0 0
  %1355 = vmatprep.subr.bf16.mxu0 0
  %1356 = vmatpush1.bf16.msra.mxu0 0
  %1357 = vmatprep.subr.bf16.mxu0 0
  %1358 = vmatpush1.bf16.msra.mxu0 %v83
  %1359 = vmatprep.subr.bf16.mxu0 0
  %1360 = vmatpush1.bf16.msra.mxu0 %v82
  %1361 = vmatprep.subr.bf16.mxu0 0
  %1362 = vmatpush2.bf16.msra.mxu0 0
  %1363 = vmatprep.subr.bf16.mxu0 0
  %1364 = vmatpush2.bf16.msra.mxu0 0
  %1365 = vmatprep.subr.bf16.mxu0 0
  %1366 = vmatpush2.bf16.msra.mxu0 0
  %1367 = vmatprep.subr.bf16.mxu0 0
  %1368 = vmatpush2.bf16.msra.mxu0 0
  %1369 = vmatprep.subr.bf16.mxu0 0
  %1370 = vmatpush2.bf16.msra.mxu0 0
  %1371 = vmatprep.subr.bf16.mxu0 0
  %1372 = vmatpush2.bf16.msra.mxu0 0
  %1373 = vmatprep.subr.bf16.mxu0 0
  %1374 = vmatpush2.bf16.msra.mxu0 0
  %1375 = vmatprep.subr.bf16.mxu0 0
  %1376 = vmatpush2.bf16.msra.mxu0 0
  %1377 = vmatprep.mubr.bf16.mxu0 0
  %1378 = vmatmul.mubr.bf16.gmra.mxu0 %v1343
  %v1379 = vpop.f32.mrf.mxu0
  %v1380 = vadd.f32 0.0, %v1379
  %v1381 = vpop.f32.mrf.mxu0
  %v1382 = vpop.f32.mrf.mxu0
  %v1383 = vpop.f32.mrf.mxu0
  %1384 = vdwg.mxu0
  %v1385 = vadd.f32 %v1337, %v1380
  %v1386 = vxor.u32 %v1385, 2147483648
  %v1387 = vmul.f32 %v1386, 1.442695
  %v1388 = vpow.pop %v1387
  %v1389 = vadd.f32 %v1388, 1.0
  %v1390 = vrcp.pop %v1389
  %v1391 = vmul.f32 1.0, %v1390
  %v1392 = vtanh.pop %v1385
  %v1393 = vmul.f32 %v1391, %v1201
  %1395 = vrot.lane.b32.xlu0 %v1392, 64
  %v1396 = vpop.permute.xlu0 %1395
  %v1398 = vmul.f32 %v1391, %v1396
  %1400 = vrot.lane.b32.xlu0 %v1398, 32
  %v1401 = vpop.permute.xlu0 %1400
  %v1403 = vadd.f32 %v1393, %v1401
  %v1404 = vtanh.pop %v1403
  %1406 = vrot.lane.b32.xlu0 %v1404, 64
  %v1407 = vpop.permute.xlu0 %1406
  %v1409 = vmul.f32 %v1391, %v1407
  %1411 = vrot.lane.b32.xlu0 %v1409, 32
  %v1412 = vpop.permute.xlu0 %1411
  %1415 = vrot.lane.b32.xlu0 %v1284, 64
  %v1416 = vpop.permute.xlu0 %1415
  %v1418 = vsel %vm86, %v1412, %v1416
  %v1419 = vpack.c.bf16 %v1418, %v1418
  %v1421 = vsel %vm193, %v1419, 0
  %1423 = vmatprep.subr.bf16.mxu0 0
  %1424 = vmatpush1.bf16.msra.mxu0 0
  %1425 = vmatprep.subr.bf16.mxu0 0
  %1426 = vmatpush1.bf16.msra.mxu0 0
  %1427 = vmatprep.subr.bf16.mxu0 0
  %1428 = vmatpush1.bf16.msra.mxu0 0
  %1429 = vmatprep.subr.bf16.mxu0 0
  %1430 = vmatpush1.bf16.msra.mxu0 0
  %1431 = vmatprep.subr.bf16.mxu0 0
  %1432 = vmatpush1.bf16.msra.mxu0 %v188
  %1433 = vmatprep.subr.bf16.mxu0 0
  %1434 = vmatpush1.bf16.msra.mxu0 %v187
  %1435 = vmatprep.subr.bf16.mxu0 0
  %1436 = vmatpush1.bf16.msra.mxu0 %v186
  %1437 = vmatprep.subr.bf16.mxu0 0
  %1438 = vmatpush1.bf16.msra.mxu0 %v185
  %1439 = vmatprep.subr.bf16.mxu0 0
  %1440 = vmatpush2.bf16.msra.mxu0 0
  %1441 = vmatprep.subr.bf16.mxu0 0
  %1442 = vmatpush2.bf16.msra.mxu0 0
  %1443 = vmatprep.subr.bf16.mxu0 0
  %1444 = vmatpush2.bf16.msra.mxu0 0
  %1445 = vmatprep.subr.bf16.mxu0 0
  %1446 = vmatpush2.bf16.msra.mxu0 0
  %1447 = vmatprep.subr.bf16.mxu0 0
  %1448 = vmatpush2.bf16.msra.mxu0 0
  %1449 = vmatprep.subr.bf16.mxu0 0
  %1450 = vmatpush2.bf16.msra.mxu0 0
  %1451 = vmatprep.subr.bf16.mxu0 0
  %1452 = vmatpush2.bf16.msra.mxu0 0
  %1453 = vmatprep.subr.bf16.mxu0 0
  %1454 = vmatpush2.bf16.msra.mxu0 0
  %1455 = vmatprep.mubr.bf16.mxu0 0
  %1456 = vmatmul.mubr.bf16.gmra.mxu0 %v1421
  %v1457 = vpop.f32.mrf.mxu0
  %v1458 = vadd.f32 %v60, %v1457
  %v1459 = vpop.f32.mrf.mxu0
  %v1460 = vpop.f32.mrf.mxu0
  %v1461 = vpop.f32.mrf.mxu0
  %1462 = vdwg.mxu0
  %v1463 = vxor.u32 %v1458, 2147483648
  %v1464 = vmul.f32 %v1463, 1.442695
  %v1465 = vpow.pop %v1464
  %v1466 = vadd.f32 %v1465, 1.0
  %v1467 = vrcp.pop %v1466
  %v1468 = vmul.f32 1.0, %v1467
  %v1469 = vtanh.pop %v1458
  %v1470 = vmul.f32 %v1468, %v1278
  %1472 = vrot.lane.b32.xlu0 %v1469, 64
  %v1473 = vpop.permute.xlu0 %1472
  %v1475 = vmul.f32 %v1468, %v1473
  %1477 = vrot.lane.b32.xlu0 %v1475, 32
  %v1478 = vpop.permute.xlu0 %1477
  %v1480 = vadd.f32 %v1470, %v1478
  %v1481 = vtanh.pop %v1480
  %1483 = vrot.lane.b32.xlu0 %v1481, 64
  %v1484 = vpop.permute.xlu0 %1483
  %v1486 = vmul.f32 %v1468, %v1484
  %v1487 = vpack.c.bf16 %v1486, %v1486
  %s1488 = scalar_lea.vmem %s1, 48
  %v1489 = vld [vmem:[%s1488] sm:$0xff]
  %1491 = vrot.lane.b32.xlu0 %v1487, 32
  %v1492 = vpop.permute.xlu0 %1491
  %v1494 = vsel %vm86, %v1492, 0
  %1496 = vmatprep.subr.bf16.mxu0 0
  %1497 = vmatpush1.bf16.msra.mxu0 0
  %1498 = vmatprep.subr.bf16.mxu0 0
  %1499 = vmatpush1.bf16.msra.mxu0 0
  %1500 = vmatprep.subr.bf16.mxu0 0
  %1501 = vmatpush1.bf16.msra.mxu0 0
  %1502 = vmatprep.subr.bf16.mxu0 0
  %1503 = vmatpush1.bf16.msra.mxu0 0
  %1504 = vmatprep.subr.bf16.mxu0 0
  %1505 = vmatpush1.bf16.msra.mxu0 0
  %1506 = vmatprep.subr.bf16.mxu0 0
  %1507 = vmatpush1.bf16.msra.mxu0 0
  %1508 = vmatprep.subr.bf16.mxu0 0
  %1509 = vmatpush1.bf16.msra.mxu0 %v279
  %1510 = vmatprep.subr.bf16.mxu0 0
  %1511 = vmatpush1.bf16.msra.mxu0 %v278
  %1512 = vmatprep.subr.bf16.mxu0 0
  %1513 = vmatpush2.bf16.msra.mxu0 0
  %1514 = vmatprep.subr.bf16.mxu0 0
  %1515 = vmatpush2.bf16.msra.mxu0 0
  %1516 = vmatprep.subr.bf16.mxu0 0
  %1517 = vmatpush2.bf16.msra.mxu0 0
  %1518 = vmatprep.subr.bf16.mxu0 0
  %1519 = vmatpush2.bf16.msra.mxu0 0
  %1520 = vmatprep.subr.bf16.mxu0 0
  %1521 = vmatpush2.bf16.msra.mxu0 0
  %1522 = vmatprep.subr.bf16.mxu0 0
  %1523 = vmatpush2.bf16.msra.mxu0 0
  %1524 = vmatprep.subr.bf16.mxu0 0
  %1525 = vmatpush2.bf16.msra.mxu0 0
  %1526 = vmatprep.subr.bf16.mxu0 0
  %1527 = vmatpush2.bf16.msra.mxu0 0
  %1528 = vmatprep.mubr.bf16.mxu0 0
  %1529 = vmatmul.mubr.bf16.gmra.mxu0 %v1494
  %v1530 = vpop.f32.mrf.mxu0
  %v1531 = vadd.f32 %v1489, %v1530
  %v1532 = vpop.f32.mrf.mxu0
  %v1533 = vpop.f32.mrf.mxu0
  %v1534 = vpop.f32.mrf.mxu0
  %1535 = vdwg.mxu0
  %s1536 = scalar_lea.vmem %s8, 48
  %1537 = vst [vmem:[%s1536] sm:$0xff] %v1531
  %s1538 = scalar_lea.vmem %s0, 56
  %v1539 = vld [vmem:[%s1538] sm:$0xff]
  %v1540 = vpack.c.bf16 %v1409, %v1409
  %1542 = vrot.lane.b32.xlu0 %v1540, 32
  %v1543 = vpop.permute.xlu0 %1542
  %v1545 = vsel %vm86, %v1543, 0
  %1547 = vmatprep.subr.bf16.mxu0 0
  %1548 = vmatpush1.bf16.msra.mxu0 0
  %1549 = vmatprep.subr.bf16.mxu0 0
  %1550 = vmatpush1.bf16.msra.mxu0 0
  %1551 = vmatprep.subr.bf16.mxu0 0
  %1552 = vmatpush1.bf16.msra.mxu0 0
  %1553 = vmatprep.subr.bf16.mxu0 0
  %1554 = vmatpush1.bf16.msra.mxu0 0
  %1555 = vmatprep.subr.bf16.mxu0 0
  %1556 = vmatpush1.bf16.msra.mxu0 0
  %1557 = vmatprep.subr.bf16.mxu0 0
  %1558 = vmatpush1.bf16.msra.mxu0 0
  %1559 = vmatprep.subr.bf16.mxu0 0
  %1560 = vmatpush1.bf16.msra.mxu0 %v83
  %1561 = vmatprep.subr.bf16.mxu0 0
  %1562 = vmatpush1.bf16.msra.mxu0 %v82
  %1563 = vmatprep.subr.bf16.mxu0 0
  %1564 = vmatpush2.bf16.msra.mxu0 0
  %1565 = vmatprep.subr.bf16.mxu0 0
  %1566 = vmatpush2.bf16.msra.mxu0 0
  %1567 = vmatprep.subr.bf16.mxu0 0
  %1568 = vmatpush2.bf16.msra.mxu0 0
  %1569 = vmatprep.subr.bf16.mxu0 0
  %1570 = vmatpush2.bf16.msra.mxu0 0
  %1571 = vmatprep.subr.bf16.mxu0 0
  %1572 = vmatpush2.bf16.msra.mxu0 0
  %1573 = vmatprep.subr.bf16.mxu0 0
  %1574 = vmatpush2.bf16.msra.mxu0 0
  %1575 = vmatprep.subr.bf16.mxu0 0
  %1576 = vmatpush2.bf16.msra.mxu0 0
  %1577 = vmatprep.subr.bf16.mxu0 0
  %1578 = vmatpush2.bf16.msra.mxu0 0
  %1579 = vmatprep.mubr.bf16.mxu0 0
  %1580 = vmatmul.mubr.bf16.gmra.mxu0 %v1545
  %v1581 = vpop.f32.mrf.mxu0
  %v1582 = vadd.f32 0.0, %v1581
  %v1583 = vpop.f32.mrf.mxu0
  %v1584 = vpop.f32.mrf.mxu0
  %v1585 = vpop.f32.mrf.mxu0
  %1586 = vdwg.mxu0
  %v1587 = vadd.f32 %v1539, %v1582
  %v1588 = vxor.u32 %v1587, 2147483648
  %v1589 = vmul.f32 %v1588, 1.442695
  %v1590 = vpow.pop %v1589
  %v1591 = vadd.f32 %v1590, 1.0
  %v1592 = vrcp.pop %v1591
  %v1593 = vmul.f32 1.0, %v1592
  %v1594 = vtanh.pop %v1587
  %v1595 = vmul.f32 %v1593, %v1403
  %1597 = vrot.lane.b32.xlu0 %v1594, 64
  %v1598 = vpop.permute.xlu0 %1597
  %v1600 = vmul.f32 %v1593, %v1598
  %1602 = vrot.lane.b32.xlu0 %v1600, 32
  %v1603 = vpop.permute.xlu0 %1602
  %v1605 = vadd.f32 %v1595, %v1603
  %v1606 = vtanh.pop %v1605
  %1608 = vrot.lane.b32.xlu0 %v1606, 64
  %v1609 = vpop.permute.xlu0 %1608
  %v1611 = vmul.f32 %v1593, %v1609
  %1613 = vrot.lane.b32.xlu0 %v1611, 32
  %v1614 = vpop.permute.xlu0 %1613
  %1617 = vrot.lane.b32.xlu0 %v1486, 64
  %v1618 = vpop.permute.xlu0 %1617
  %v1620 = vsel %vm86, %v1614, %v1618
  %v1621 = vpack.c.bf16 %v1620, %v1620
  %v1623 = vsel %vm193, %v1621, 0
  %1625 = vmatprep.subr.bf16.mxu0 0
  %1626 = vmatpush1.bf16.msra.mxu0 0
  %1627 = vmatprep.subr.bf16.mxu0 0
  %1628 = vmatpush1.bf16.msra.mxu0 0
  %1629 = vmatprep.subr.bf16.mxu0 0
  %1630 = vmatpush1.bf16.msra.mxu0 0
  %1631 = vmatprep.subr.bf16.mxu0 0
  %1632 = vmatpush1.bf16.msra.mxu0 0
  %1633 = vmatprep.subr.bf16.mxu0 0
  %1634 = vmatpush1.bf16.msra.mxu0 %v188
  %1635 = vmatprep.subr.bf16.mxu0 0
  %1636 = vmatpush1.bf16.msra.mxu0 %v187
  %1637 = vmatprep.subr.bf16.mxu0 0
  %1638 = vmatpush1.bf16.msra.mxu0 %v186
  %1639 = vmatprep.subr.bf16.mxu0 0
  %1640 = vmatpush1.bf16.msra.mxu0 %v185
  %1641 = vmatprep.subr.bf16.mxu0 0
  %1642 = vmatpush2.bf16.msra.mxu0 0
  %1643 = vmatprep.subr.bf16.mxu0 0
  %1644 = vmatpush2.bf16.msra.mxu0 0
  %1645 = vmatprep.subr.bf16.mxu0 0
  %1646 = vmatpush2.bf16.msra.mxu0 0
  %1647 = vmatprep.subr.bf16.mxu0 0
  %1648 = vmatpush2.bf16.msra.mxu0 0
  %1649 = vmatprep.subr.bf16.mxu0 0
  %1650 = vmatpush2.bf16.msra.mxu0 0
  %1651 = vmatprep.subr.bf16.mxu0 0
  %1652 = vmatpush2.bf16.msra.mxu0 0
  %1653 = vmatprep.subr.bf16.mxu0 0
  %1654 = vmatpush2.bf16.msra.mxu0 0
  %1655 = vmatprep.subr.bf16.mxu0 0
  %1656 = vmatpush2.bf16.msra.mxu0 0
  %1657 = vmatprep.mubr.bf16.mxu0 0
  %1658 = vmatmul.mubr.bf16.gmra.mxu0 %v1623
  %v1659 = vpop.f32.mrf.mxu0
  %v1660 = vadd.f32 %v60, %v1659
  %v1661 = vpop.f32.mrf.mxu0
  %v1662 = vpop.f32.mrf.mxu0
  %v1663 = vpop.f32.mrf.mxu0
  %1664 = vdwg.mxu0
  %v1665 = vxor.u32 %v1660, 2147483648
  %v1666 = vmul.f32 %v1665, 1.442695
  %v1667 = vpow.pop %v1666
  %v1668 = vadd.f32 %v1667, 1.0
  %v1669 = vrcp.pop %v1668
  %v1670 = vmul.f32 1.0, %v1669
  %v1671 = vtanh.pop %v1660
  %v1672 = vmul.f32 %v1670, %v1480
  %1674 = vrot.lane.b32.xlu0 %v1671, 64
  %v1675 = vpop.permute.xlu0 %1674
  %v1677 = vmul.f32 %v1670, %v1675
  %1679 = vrot.lane.b32.xlu0 %v1677, 32
  %v1680 = vpop.permute.xlu0 %1679
  %v1682 = vadd.f32 %v1672, %v1680
  %v1683 = vtanh.pop %v1682
  %1685 = vrot.lane.b32.xlu0 %v1683, 64
  %v1686 = vpop.permute.xlu0 %1685
  %v1688 = vmul.f32 %v1670, %v1686
  %v1689 = vpack.c.bf16 %v1688, %v1688
  %s1690 = scalar_lea.vmem %s1, 56
  %v1691 = vld [vmem:[%s1690] sm:$0xff]
  %1693 = vrot.lane.b32.xlu0 %v1689, 32
  %v1694 = vpop.permute.xlu0 %1693
  %v1696 = vsel %vm86, %v1694, 0
  %1698 = vmatprep.subr.bf16.mxu0 0
  %1699 = vmatpush1.bf16.msra.mxu0 0
  %1700 = vmatprep.subr.bf16.mxu0 0
  %1701 = vmatpush1.bf16.msra.mxu0 0
  %1702 = vmatprep.subr.bf16.mxu0 0
  %1703 = vmatpush1.bf16.msra.mxu0 0
  %1704 = vmatprep.subr.bf16.mxu0 0
  %1705 = vmatpush1.bf16.msra.mxu0 0
  %1706 = vmatprep.subr.bf16.mxu0 0
  %1707 = vmatpush1.bf16.msra.mxu0 0
  %1708 = vmatprep.subr.bf16.mxu0 0
  %1709 = vmatpush1.bf16.msra.mxu0 0
  %1710 = vmatprep.subr.bf16.mxu0 0
  %1711 = vmatpush1.bf16.msra.mxu0 %v279
  %1712 = vmatprep.subr.bf16.mxu0 0
  %1713 = vmatpush1.bf16.msra.mxu0 %v278
  %1714 = vmatprep.subr.bf16.mxu0 0
  %1715 = vmatpush2.bf16.msra.mxu0 0
  %1716 = vmatprep.subr.bf16.mxu0 0
  %1717 = vmatpush2.bf16.msra.mxu0 0
  %1718 = vmatprep.subr.bf16.mxu0 0
  %1719 = vmatpush2.bf16.msra.mxu0 0
  %1720 = vmatprep.subr.bf16.mxu0 0
  %1721 = vmatpush2.bf16.msra.mxu0 0
  %1722 = vmatprep.subr.bf16.mxu0 0
  %1723 = vmatpush2.bf16.msra.mxu0 0
  %1724 = vmatprep.subr.bf16.mxu0 0
  %1725 = vmatpush2.bf16.msra.mxu0 0
  %1726 = vmatprep.subr.bf16.mxu0 0
  %1727 = vmatpush2.bf16.msra.mxu0 0
  %1728 = vmatprep.subr.bf16.mxu0 0
  %1729 = vmatpush2.bf16.msra.mxu0 0
  %1730 = vmatprep.mubr.bf16.mxu0 0
  %1731 = vmatmul.mubr.bf16.gmra.mxu0 %v1696
  %v1732 = vpop.f32.mrf.mxu0
  %v1733 = vadd.f32 %v1691, %v1732
  %v1734 = vpop.f32.mrf.mxu0
  %v1735 = vpop.f32.mrf.mxu0
  %v1736 = vpop.f32.mrf.mxu0
  %1737 = vdwg.mxu0
  %s1738 = scalar_lea.vmem %s8, 56
  %1739 = vst [vmem:[%s1738] sm:$0xff] %v1733
  %1740 = vst.msk [vmem:[#allocation2] sm:$0xff] %vm86, %v1614
  %1742 = vrot.lane.b32.xlu0 %v1605, 96
  %v1743 = vpop.permute.xlu0 %1742
  %1745 = vst.msk [vmem:[#allocation3] sm:$0xff] %vm86, %v1743
  %1747 = vrot.lane.b32.xlu0 %v1688, 32
  %v1748 = vpop.permute.xlu0 %1747
  %1750 = vst.msk [vmem:[%s67] sm:$0xff] %vm86, %v1748
  %1752 = vrot.lane.b32.xlu0 %v1682, 96
  %v1753 = vpop.permute.xlu0 %1752
  %1755 = vst.msk [vmem:[%s70] sm:$0xff] %vm86, %v1753
  // Predicated region
  $region38: #{model_forward.1} parent=0 // pred_check
    _
  $region39: #{model_forward.1} parent=0 // pred_check_branch
    %1757 = sbr.rel (0) target = $region41
  $region40: #{model_forward.1} parent=0 // pred_region
    _
  $region41: #{model_forward.1} parent=0 // pred_fallthru
    _
  // Predicated region
  $region42: #{model_forward.1} parent=0 // pred_check
    _
  $region43: #{model_forward.1} parent=0 // pred_check_branch
    %1759 = sbr.rel (0) target = $region45
  $region44: #{model_forward.1} parent=0 // pred_region
    _
  $region45: #{model_forward.1} parent=0 // pred_fallthru
    _

</llo_original>
